<compile_context>
chip_gen: v6e
topology: v6e:2x2x1
jax: 0.10.0
libtpu: 0.0.40
codegen_flags: <defaults>
</compile_context>

<pallas_src>
import jax
import jax.numpy as jnp
import numpy as np
from jax.experimental import pallas as pl
from jax.experimental.pallas import tpu as pltpu

D_MODEL = 64
D_PFFN = 256
N_HEADS = 4
HEAD_DIM = D_MODEL // N_HEADS
NORM_EPS = 1e-5
FC_FACTOR = 0.5


# ----------------------------- kernel helpers ------------------------------
def _layer_norm(x):
    """f32 LayerNorm over the last dim, affine folded into the following matmul."""
    mu = jnp.mean(x, axis=-1, keepdims=True)
    xc = x - mu
    var = jnp.mean(xc * xc, axis=-1, keepdims=True)
    return xc * jax.lax.rsqrt(var + NORM_EPS)


def _pffn(x, w1, b1, w2, b2):
    """Position-wise FFN; bf16 matmul operands, f32 accumulation, f32 elementwise.
    fc_factor (0.5) is already folded into w2/b2 by the wrapper."""
    h = jnp.dot(x.astype(jnp.bfloat16), w1, preferred_element_type=jnp.float32) + b1
    h = jnp.maximum(h, 0.0)  # relu
    return jnp.dot(h.astype(jnp.bfloat16), w2, preferred_element_type=jnp.float32) + b2


# --------------------------------- kernel ----------------------------------
def macaron_kernel(
    x_ref,
    w_up_ref,    # (2, D, F)  bf16  : [pffn1.w1 | pffn2.w1]   (LN gamma folded in)
    w_down_ref,  # (2, F, D)  bf16  : [pffn1.w2 | pffn2.w2]   (* fc_factor)
    wqkv_ref,    # (D, 3D)    bf16  : fused Q|K|V             (LN gamma + scale folded)
    wo_ref,      # (D, D)     bf16
    b_up_ref,    # (2, 1, F)  f32
    b_down_ref,  # (2, 1, D)  f32
    bqkv_ref,    # (1, 3D)    f32
    bo_ref,      # (1, D)     f32
    o_ref,
):
    bb, T, D = x_ref.shape
    R = bb * T

    # Flatten the (bb, T, D) block to (R, D) rows for all row-wise work.
    x = x_ref[...].reshape(R, D)

    # ---- macaron half-FFN #1 : x = 0.5 * PFFN1(LN(x)) + x  (0.5 folded) ----
    y = _layer_norm(x)
    x = x + _pffn(y, w_up_ref[0], b_up_ref[0], w_down_ref[0], b_down_ref[0])

    # ---- multi-head self-attention : x = MHSA(LN(x)) + x ----
    y = _layer_norm(x)
    # Single fused QKV projection: (R, D) @ (D, 3D) -> (R, 3D)
    qkv = jnp.dot(y.astype(jnp.bfloat16), wqkv_ref[...],
                  preferred_element_type=jnp.float32) + bqkv_ref[...]
    qkv = qkv.reshape(bb, T, 3 * D)  # keep the batch axis: attention is per element

    attn = jnp.zeros((R, D), jnp.float32)
    for h in range(N_HEADS):  # static unroll, N_HEADS is small
        lo = h * HEAD_DIM
        # 1/sqrt(head_dim) already folded into the Q weights.
        qh = qkv[:, :, lo:lo + HEAD_DIM].astype(jnp.bfloat16)                  # (bb,T,hd)
        kh = qkv[:, :, D + lo:D + lo + HEAD_DIM].astype(jnp.bfloat16)
        vh = qkv[:, :, 2 * D + lo:2 * D + lo + HEAD_DIM].astype(jnp.bfloat16)

        s = jnp.einsum("btd,bsd->bts", qh, kh,
                       preferred_element_type=jnp.float32)                     # (bb,T,T)
        s = s - jnp.max(s, axis=-1, keepdims=True)
        p = jnp.exp(s)                                                         # <= 1
        l = jnp.sum(p, axis=-1, keepdims=True)                                 # (bb,T,1)

        # Deferred normalization: scale the (bb,T,hd) context, not the (bb,T,T) probs.
        ctx = jnp.einsum("bts,bsd->btd", p.astype(jnp.bfloat16), vh,
                         preferred_element_type=jnp.float32)                   # (bb,T,hd)
        ctx = ctx * pl.reciprocal(l, approx=True)

        # Per-head output-projection accumulation (no lane-axis concat).
        attn = attn + jnp.dot(ctx.reshape(R, HEAD_DIM).astype(jnp.bfloat16),
                              wo_ref[lo:lo + HEAD_DIM, :],
                              preferred_element_type=jnp.float32)
    x = x + attn + bo_ref[...]

    # ---- macaron half-FFN #2 : x = 0.5 * PFFN2(LN(x)) + x  (0.5 folded) ----
    y = _layer_norm(x)
    x = x + _pffn(y, w_up_ref[1], b_up_ref[1], w_down_ref[1], b_down_ref[1])

    o_ref[...] = x.reshape(bb, T, D)


# -------------------------------- wrapper -----------------------------------
def _tc_count():
    """TensorCores per JAX device (best effort; conservative default = 1)."""
    try:
        d = jax.devices()[0]
        nc = getattr(d, "num_cores", None)
        if isinstance(nc, int) and nc > 0:
            return nc
        kind = str(getattr(d, "device_kind", "")).lower()
        if any(k in kind for k in ("v7", "v4", "v5p")):
            return 2
    except Exception:
        pass
    return 1


def _block_vmem_bytes(bb, T):
    """Rough live-VMEM estimate for one grid step (used for block sizing only)."""
    R = bb * T
    io = 4 * R * D_MODEL * 4                                        # double-buffered in + out
    row_f32 = R * (2 * D_MODEL + D_PFFN + 3 * D_MODEL + D_MODEL) * 4  # x, y, hidden, qkv, attn
    row_bf16 = R * (D_PFFN + 3 * D_MODEL) * 2                        # bf16 casts
    scores = 8 * bb * T * T * 4                                      # unrolled heads keep several live
    params = 2 * (2 * D_MODEL * D_PFFN * 2 * 2
                  + D_MODEL * 3 * D_MODEL * 2 + D_MODEL * D_MODEL * 2)
    return io + row_f32 + row_bf16 + scores + params


def _pick_block_batch(B, T, n_cores, budget=20 << 20, max_rows=2048):
    """Largest divisor of B whose block fits the VMEM budget and row cap; on
    multi-TensorCore chips prefer a grid length divisible by the core count."""
    def ok(bb):
        return bb * T <= max_rows and _block_vmem_bytes(bb, T) <= budget

    divisors = [d for d in range(1, B + 1) if B % d == 0]
    cands = [d for d in divisors if ok(d)] or [1]
    bb = max(cands)
    if n_cores >= 2:
        even = [d for d in cands if (B // d) % n_cores == 0]
        if even:
            bb = max(even)
    return bb


def _prep_params(params):
    """Fold constants / LN affines and pack the weights into a few slabs."""
    (ln1_g, ln1_b, p1_w1, p1_b1, p1_w2, p1_b2,
     lns_g, lns_b,
     wq, bq, wk, bk, wv, bv, wo, bo,
     ln2_g, ln2_b, p2_w1, p2_b1, p2_w2, p2_b2) = params
    bf16, f32 = jnp.bfloat16, jnp.float32

    def fold_ln(g, b, w, bias):
        # LN affine folded into the following matmul:
        #   (xc*rsqrt*g + b) @ W + bias = (xc*rsqrt) @ (g^T*W) + (b @ W + bias)
        return w * g.reshape(-1, 1), bias + b @ w

    # Fold attention scale into Q (exact: 1/sqrt(16) = 0.25).
    scale = float(HEAD_DIM) ** -0.5
    wqkv = jnp.concatenate([wq * scale, wk, wv], axis=1)   # (D, 3D)
    bqkv = jnp.concatenate([bq * scale, bk, bv], axis=1)   # (1, 3D)

    # Fold the three LayerNorm affines into the matmuls they feed.
    p1_w1, p1_b1 = fold_ln(ln1_g, ln1_b, p1_w1, p1_b1)
    wqkv, bqkv = fold_ln(lns_g, lns_b, wqkv, bqkv)
    p2_w1, p2_b1 = fold_ln(ln2_g, ln2_b, p2_w1, p2_b1)

    # Fold fc_factor into the FFN down-projections (exact: *0.5).
    p1_w2, p1_b2 = p1_w2 * FC_FACTOR, p1_b2 * FC_FACTOR
    p2_w2, p2_b2 = p2_w2 * FC_FACTOR, p2_b2 * FC_FACTOR

    w_up = jnp.stack([p1_w1, p2_w1]).astype(bf16)      # (2, D, F)
    w_down = jnp.stack([p1_w2, p2_w2]).astype(bf16)    # (2, F, D)
    b_up = jnp.stack([p1_b1, p2_b1]).astype(f32)       # (2, 1, F)
    b_down = jnp.stack([p1_b2, p2_b2]).astype(f32)     # (2, 1, D)
    return (w_up, w_down, wqkv.astype(bf16), wo.astype(bf16),
            b_up, b_down, bqkv.astype(f32), bo.astype(f32))


def macaron_encoder_layer(feature, params):
    """feature: (B, T, D) float32.  params: ordered list of 22 weight arrays in
    math layout (y = x @ W + b), same ordering as the PyTorch module."""
    B, T, D = feature.shape
    assert D == D_MODEL

    kparams = _prep_params(params)
    n_cores = _tc_count()
    bb = _pick_block_batch(B, T, n_cores)
    grid = (B // bb,)

    def const_spec(shape):
        nd = len(shape)
        return pl.BlockSpec(shape, lambda b, _n=nd: (0,) * _n)

    in_specs = [pl.BlockSpec((bb, T, D), lambda b: (b, 0, 0))]
    in_specs += [const_spec(p.shape) for p in kparams]

    # Advisory cost estimate for XLA's scheduler.
    rows = B * T
    flops = int(
        8 * rows * D * D_PFFN                  # two FFNs, two matmuls each
        + 2 * rows * D * (3 * D)               # fused QKV projection
        + 2 * rows * D * D                     # output projection
        + 4 * B * N_HEADS * T * T * HEAD_DIM   # scores + probs @ V
    )
    transcendentals = int(B * N_HEADS * T * T + 4 * rows)
    param_bytes = sum(int(np.prod(p.shape)) * p.dtype.itemsize for p in kparams)
    bytes_accessed = int(2 * feature.size * 4 + param_bytes)

    # Explicit VMEM budget: default scoped limits (16/32 MiB) are too small for
    # large blocks; clamp to <= 56 MiB so it stays safe on v7x (64 MiB physical).
    vmem_limit = int(max(32 << 20, min(56 << 20, 2 * _block_vmem_bytes(bb, T))))

    grid_spec = pltpu.PrefetchScalarGridSpec(
        num_scalar_prefetch=0,
        grid=grid,
        in_specs=in_specs,
        out_specs=pl.BlockSpec((bb, T, D), lambda b: (b, 0, 0)),
    )
    return pl.pallas_call(
        macaron_kernel,
        out_shape=jax.ShapeDtypeStruct((B, T, D), jnp.float32),
        grid_spec=grid_spec,
        compiler_params=pltpu.CompilerParams(
            dimension_semantics=("parallel",),
            vmem_limit_bytes=vmem_limit,
        ),
        cost_estimate=pl.CostEstimate(flops=flops,
                                      transcendentals=transcendentals,
                                      bytes_accessed=bytes_accessed),
    )(feature, *kparams)


# --------------------------- pure-JAX reference ------------------------------
def reference(feature, params):
    (ln1_g, ln1_b, p1_w1, p1_b1, p1_w2, p1_b2,
     lns_g, lns_b,
     wq, bq, wk, bk, wv, bv, wo, bo,
     ln2_g, ln2_b, p2_w1, p2_b1, p2_w2, p2_b2) = params

    def ln(x, g, b):
        mu = x.mean(-1, keepdims=True)
        var = ((x - mu) ** 2).mean(-1, keepdims=True)
        return (x - mu) / jnp.sqrt(var + NORM_EPS) * g + b

    def pffn(x, w1, b1, w2, b2):
        return jnp.maximum(x @ w1 + b1, 0.0) @ w2 + b2

    x = feature
    x = FC_FACTOR * pffn(ln(x, ln1_g, ln1_b), p1_w1, p1_b1, p1_w2, p1_b2) + x

    y = ln(x, lns_g, lns_b)
    B, T, _ = y.shape
    q = (y @ wq + bq).reshape(B, T, N_HEADS, HEAD_DIM).transpose(0, 2, 1, 3)
    k = (y @ wk + bk).reshape(B, T, N_HEADS, HEAD_DIM).transpose(0, 2, 1, 3)
    v = (y @ wv + bv).reshape(B, T, N_HEADS, HEAD_DIM).transpose(0, 2, 1, 3)
    s = jnp.einsum("bhtd,bhsd->bhts", q, k) / jnp.sqrt(jnp.float32(HEAD_DIM))
    p = jax.nn.softmax(s, axis=-1)
    ctx = jnp.einsum("bhts,bhsd->bhtd", p, v).transpose(0, 2, 1, 3).reshape(B, T, D_MODEL)
    x = ctx @ wo + bo + x

    x = FC_FACTOR * pffn(ln(x, ln2_g, ln2_b), p2_w1, p2_b1, p2_w2, p2_b2) + x
    return x


# ---------------------------------- main ------------------------------------
def make_params(key):
    D, F = D_MODEL, D_PFFN
    ks = jax.random.split(key, 16)
    rnd = lambda k, shape: (jax.random.normal(k, shape, jnp.float32) * 0.05)
    ones = lambda shape: jnp.ones(shape, jnp.float32)
    zeros = lambda shape: jnp.zeros(shape, jnp.float32)
    return [
        # norm_pffn1 (LayerNorm)
        ones((1, D)), zeros((1, D)),
        # pffn1: Linear(D->F), Linear(F->D)
        rnd(ks[0], (D, F)), rnd(ks[1], (1, F)), rnd(ks[2], (F, D)), rnd(ks[3], (1, D)),
        # norm_sattn (LayerNorm)
        ones((1, D)), zeros((1, D)),
        # self_attn: q/k/v/out projections (D->D)
        rnd(ks[4], (D, D)), rnd(ks[5], (1, D)),
        rnd(ks[6], (D, D)), rnd(ks[7], (1, D)),
        rnd(ks[8], (D, D)), rnd(ks[9], (1, D)),
        rnd(ks[10], (D, D)), rnd(ks[11], (1, D)),
        # norm_pffn2 (LayerNorm)
        ones((1, D)), zeros((1, D)),
        # pffn2 (shared_pffn=False -> independent weights)
        rnd(ks[12], (D, F)), rnd(ks[13], (1, F)), rnd(ks[14], (F, D)), rnd(ks[15], (1, D)),
    ]


if __name__ == "__main__":
    key = jax.random.PRNGKey(0)
    k_x, k_p = jax.random.split(key)

    B, T = 2, 16
    feature = jax.random.normal(k_x, (B, T, D_MODEL), jnp.float32)
    params = make_params(k_p)

    out = macaron_encoder_layer(feature, params)
    out = jax.block_until_ready(out)

    ref = reference(feature, params)
    # bf16 matmul operands (f32 accumulation) + approx reciprocal -> looser tolerance.
    np.testing.assert_allclose(np.asarray(out), np.asarray(ref), rtol=2e-2, atol=2e-2)

    print("KERNEL_OK")
</pallas_src>

<mosaic_0001>
module attributes {stable_mosaic.version = 11 : i64} {
  func.func @macaron_kernel(%arg0: i32, %arg1: memref<2x16x64xf32, #tpu.memory_space<vmem>>, %arg2: memref<2x64x256xbf16, #tpu.memory_space<vmem>>, %arg3: memref<2x256x64xbf16, #tpu.memory_space<vmem>>, %arg4: memref<64x192xbf16, #tpu.memory_space<vmem>>, %arg5: memref<64x64xbf16, #tpu.memory_space<vmem>>, %arg6: memref<2x1x256xf32, #tpu.memory_space<vmem>>, %arg7: memref<2x1x64xf32, #tpu.memory_space<vmem>>, %arg8: memref<1x192xf32, #tpu.memory_space<vmem>>, %arg9: memref<1x64xf32, #tpu.memory_space<vmem>>, %arg10: memref<2x16x64xf32, #tpu.memory_space<vmem>>) attributes {dimension_semantics = [#tpu.dimension_semantics<parallel>], iteration_bounds = array<i64: 1>, scalar_prefetch = 0 : i64, scratch_operands = 0 : i64, tpu.core_type = #tpu.core_type<tc>, window_params = [{transform_indices = @transform_0, window_bounds = array<i64: 2, 16, 64>}, {pipeline_mode = #tpu.pipeline_mode<synchronous>, transform_indices = @transform_1, window_bounds = array<i64: 2, 64, 256>}, {pipeline_mode = #tpu.pipeline_mode<synchronous>, transform_indices = @transform_2, window_bounds = array<i64: 2, 256, 64>}, {pipeline_mode = #tpu.pipeline_mode<synchronous>, transform_indices = @transform_3, window_bounds = array<i64: 64, 192>}, {pipeline_mode = #tpu.pipeline_mode<synchronous>, transform_indices = @transform_4, window_bounds = array<i64: 64, 64>}, {pipeline_mode = #tpu.pipeline_mode<synchronous>, transform_indices = @transform_5, window_bounds = array<i64: 2, 1, 256>}, {pipeline_mode = #tpu.pipeline_mode<synchronous>, transform_indices = @transform_6, window_bounds = array<i64: 2, 1, 64>}, {pipeline_mode = #tpu.pipeline_mode<synchronous>, transform_indices = @transform_7, window_bounds = array<i64: 1, 192>}, {pipeline_mode = #tpu.pipeline_mode<synchronous>, transform_indices = @transform_8, window_bounds = array<i64: 1, 64>}, {transform_indices = @transform_9, window_bounds = array<i64: 2, 16, 64>}]} {
    %c0 = arith.constant 0 : index
    %c0_0 = arith.constant 0 : index
    %c0_1 = arith.constant 0 : index
    %0 = vector.load %arg1[%c0, %c0_0, %c0_1] : memref<2x16x64xf32, #tpu.memory_space<vmem>>, vector<2x16x64xf32>
    %1 = vector.shape_cast %0 : vector<2x16x64xf32> to vector<32x64xf32>
    %cst = arith.constant dense<0.000000e+00> : vector<32xf32>
    %2 = vector.multi_reduction <add>, %1, %cst [1] : vector<32x64xf32> to vector<32xf32>
    %3 = vector.shape_cast %2 : vector<32xf32> to vector<32x1xf32>
    %cst_2 = arith.constant 6.400000e+01 : f32
    %4 = vector.broadcast %cst_2 : f32 to vector<32x1xf32>
    %5 = arith.divf %3, %4 : vector<32x1xf32>
    %6 = vector.broadcast %5 : vector<32x1xf32> to vector<32x64xf32>
    %7 = arith.subf %1, %6 : vector<32x64xf32>
    %8 = arith.mulf %7, %7 : vector<32x64xf32>
    %cst_3 = arith.constant dense<0.000000e+00> : vector<32xf32>
    %9 = vector.multi_reduction <add>, %8, %cst_3 [1] : vector<32x64xf32> to vector<32xf32>
    %10 = vector.shape_cast %9 : vector<32xf32> to vector<32x1xf32>
    %cst_4 = arith.constant 6.400000e+01 : f32
    %11 = vector.broadcast %cst_4 : f32 to vector<32x1xf32>
    %12 = arith.divf %10, %11 : vector<32x1xf32>
    %cst_5 = arith.constant 9.99999974E-6 : f32
    %13 = vector.broadcast %cst_5 : f32 to vector<32x1xf32>
    %14 = arith.addf %12, %13 : vector<32x1xf32>
    %15 = math.rsqrt %14 : vector<32x1xf32>
    %16 = vector.broadcast %15 : vector<32x1xf32> to vector<32x64xf32>
    %17 = arith.mulf %7, %16 : vector<32x64xf32>
    %c0_6 = arith.constant 0 : index
    %c0_7 = arith.constant 0 : index
    %c0_8 = arith.constant 0 : index
    %18 = vector.load %arg2[%c0_6, %c0_7, %c0_8] : memref<2x64x256xbf16, #tpu.memory_space<vmem>>, vector<1x64x256xbf16>
    %19 = vector.shape_cast %18 : vector<1x64x256xbf16> to vector<64x256xbf16>
    %c0_9 = arith.constant 0 : index
    %c0_10 = arith.constant 0 : index
    %c0_11 = arith.constant 0 : index
    %20 = vector.load %arg6[%c0_9, %c0_10, %c0_11] : memref<2x1x256xf32, #tpu.memory_space<vmem>>, vector<1x1x256xf32>
    %21 = vector.shape_cast %20 : vector<1x1x256xf32> to vector<1x256xf32>
    %c0_12 = arith.constant 0 : index
    %c0_13 = arith.constant 0 : index
    %c0_14 = arith.constant 0 : index
    %22 = vector.load %arg3[%c0_12, %c0_13, %c0_14] : memref<2x256x64xbf16, #tpu.memory_space<vmem>>, vector<1x256x64xbf16>
    %23 = vector.shape_cast %22 : vector<1x256x64xbf16> to vector<256x64xbf16>
    %c0_15 = arith.constant 0 : index
    %c0_16 = arith.constant 0 : index
    %c0_17 = arith.constant 0 : index
    %24 = vector.load %arg7[%c0_15, %c0_16, %c0_17] : memref<2x1x64xf32, #tpu.memory_space<vmem>>, vector<1x1x64xf32>
    %25 = vector.shape_cast %24 : vector<1x1x64xf32> to vector<1x64xf32>
    %26 = arith.truncf %17 : vector<32x64xf32> to vector<32x64xbf16>
    %cst_18 = arith.constant dense<0.000000e+00> : vector<32x256xf32>
    %27 = tpu.matmul %26, %19, %cst_18 {dimension_numbers = #tpu.dot_dimension_numbers<[1], [0], [0], [1], [0, 0, 1, 1], [], []>} : vector<32x64xbf16>, vector<64x256xbf16>, vector<32x256xf32> -> vector<32x256xf32>
    %28 = vector.broadcast %21 : vector<1x256xf32> to vector<32x256xf32>
    %29 = arith.addf %27, %28 : vector<32x256xf32>
    %cst_19 = arith.constant 0.000000e+00 : f32
    %30 = vector.broadcast %cst_19 : f32 to vector<32x256xf32>
    %31 = arith.maximumf %29, %30 : vector<32x256xf32>
    %32 = arith.truncf %31 : vector<32x256xf32> to vector<32x256xbf16>
    %cst_20 = arith.constant dense<0.000000e+00> : vector<32x64xf32>
    %33 = tpu.matmul %32, %23, %cst_20 {dimension_numbers = #tpu.dot_dimension_numbers<[1], [0], [0], [1], [0, 0, 1, 1], [], []>} : vector<32x256xbf16>, vector<256x64xbf16>, vector<32x64xf32> -> vector<32x64xf32>
    %34 = vector.broadcast %25 : vector<1x64xf32> to vector<32x64xf32>
    %35 = arith.addf %33, %34 : vector<32x64xf32>
    %36 = arith.addf %1, %35 : vector<32x64xf32>
    %cst_21 = arith.constant dense<0.000000e+00> : vector<32xf32>
    %37 = vector.multi_reduction <add>, %36, %cst_21 [1] : vector<32x64xf32> to vector<32xf32>
    %38 = vector.shape_cast %37 : vector<32xf32> to vector<32x1xf32>
    %cst_22 = arith.constant 6.400000e+01 : f32
    %39 = vector.broadcast %cst_22 : f32 to vector<32x1xf32>
    %40 = arith.divf %38, %39 : vector<32x1xf32>
    %41 = vector.broadcast %40 : vector<32x1xf32> to vector<32x64xf32>
    %42 = arith.subf %36, %41 : vector<32x64xf32>
    %43 = arith.mulf %42, %42 : vector<32x64xf32>
    %cst_23 = arith.constant dense<0.000000e+00> : vector<32xf32>
    %44 = vector.multi_reduction <add>, %43, %cst_23 [1] : vector<32x64xf32> to vector<32xf32>
    %45 = vector.shape_cast %44 : vector<32xf32> to vector<32x1xf32>
    %cst_24 = arith.constant 6.400000e+01 : f32
    %46 = vector.broadcast %cst_24 : f32 to vector<32x1xf32>
    %47 = arith.divf %45, %46 : vector<32x1xf32>
    %cst_25 = arith.constant 9.99999974E-6 : f32
    %48 = vector.broadcast %cst_25 : f32 to vector<32x1xf32>
    %49 = arith.addf %47, %48 : vector<32x1xf32>
    %50 = math.rsqrt %49 : vector<32x1xf32>
    %51 = vector.broadcast %50 : vector<32x1xf32> to vector<32x64xf32>
    %52 = arith.mulf %42, %51 : vector<32x64xf32>
    %53 = arith.truncf %52 : vector<32x64xf32> to vector<32x64xbf16>
    %c0_26 = arith.constant 0 : index
    %c0_27 = arith.constant 0 : index
    %54 = vector.load %arg4[%c0_26, %c0_27] : memref<64x192xbf16, #tpu.memory_space<vmem>>, vector<64x192xbf16>
    %cst_28 = arith.constant dense<0.000000e+00> : vector<32x192xf32>
    %55 = tpu.matmul %53, %54, %cst_28 {dimension_numbers = #tpu.dot_dimension_numbers<[1], [0], [0], [1], [0, 0, 1, 1], [], []>} : vector<32x64xbf16>, vector<64x192xbf16>, vector<32x192xf32> -> vector<32x192xf32>
    %c0_29 = arith.constant 0 : index
    %c0_30 = arith.constant 0 : index
    %56 = vector.load %arg8[%c0_29, %c0_30] : memref<1x192xf32, #tpu.memory_space<vmem>>, vector<1x192xf32>
    %57 = vector.broadcast %56 : vector<1x192xf32> to vector<32x192xf32>
    %58 = arith.addf %55, %57 : vector<32x192xf32>
    %59 = vector.shape_cast %58 : vector<32x192xf32> to vector<2x16x192xf32>
    %cst_31 = arith.constant 0.000000e+00 : f32
    %60 = vector.broadcast %cst_31 : f32 to vector<32x64xf32>
    %61 = vector.extract_strided_slice %59 {offsets = [0, 0, 0], sizes = [2, 16, 16], strides = [1, 1, 1]} : vector<2x16x192xf32> to vector<2x16x16xf32>
    %62 = arith.truncf %61 : vector<2x16x16xf32> to vector<2x16x16xbf16>
    %63 = vector.extract_strided_slice %59 {offsets = [0, 0, 64], sizes = [2, 16, 16], strides = [1, 1, 1]} : vector<2x16x192xf32> to vector<2x16x16xf32>
    %64 = arith.truncf %63 : vector<2x16x16xf32> to vector<2x16x16xbf16>
    %65 = vector.extract_strided_slice %59 {offsets = [0, 0, 128], sizes = [2, 16, 16], strides = [1, 1, 1]} : vector<2x16x192xf32> to vector<2x16x16xf32>
    %66 = arith.truncf %65 : vector<2x16x16xf32> to vector<2x16x16xbf16>
    "tpu.trace_start"() <{level = 10 : i32, message = "btd,bsd->bts"}> : () -> ()
    %cst_32 = arith.constant dense<0.000000e+00> : vector<2x16x16xf32>
    %67 = tpu.matmul %62, %64, %cst_32 {dimension_numbers = #tpu.dot_dimension_numbers<[2], [2], [1], [1], [0, 0, 0, 1, 1, 1], [0], [0]>} : vector<2x16x16xbf16>, vector<2x16x16xbf16>, vector<2x16x16xf32> -> vector<2x16x16xf32>
    "tpu.trace_stop"() : () -> ()
    %cst_33 = arith.constant dense<0xFF800000> : vector<2x16xf32>
    %68 = vector.multi_reduction <maximumf>, %67, %cst_33 [2] : vector<2x16x16xf32> to vector<2x16xf32>
    %69 = vector.shape_cast %68 : vector<2x16xf32> to vector<2x16x1xf32>
    %70 = vector.broadcast %69 : vector<2x16x1xf32> to vector<2x16x16xf32>
    %71 = arith.subf %67, %70 : vector<2x16x16xf32>
    %72 = math.exp %71 : vector<2x16x16xf32>
    %cst_34 = arith.constant dense<0.000000e+00> : vector<2x16xf32>
    %73 = vector.multi_reduction <add>, %72, %cst_34 [2] : vector<2x16x16xf32> to vector<2x16xf32>
    %74 = vector.shape_cast %73 : vector<2x16xf32> to vector<2x16x1xf32>
    %75 = arith.truncf %72 : vector<2x16x16xf32> to vector<2x16x16xbf16>
    "tpu.trace_start"() <{level = 10 : i32, message = "bts,bsd->btd"}> : () -> ()
    %cst_35 = arith.constant dense<0.000000e+00> : vector<2x16x16xf32>
    %76 = tpu.matmul %75, %66, %cst_35 {dimension_numbers = #tpu.dot_dimension_numbers<[2], [1], [1], [2], [0, 0, 0, 1, 1, 2], [0], [0]>} : vector<2x16x16xbf16>, vector<2x16x16xbf16>, vector<2x16x16xf32> -> vector<2x16x16xf32>
    "tpu.trace_stop"() : () -> ()
    %77 = tpu.reciprocal %74 {approx = true} : vector<2x16x1xf32> -> vector<2x16x1xf32>
    %78 = vector.broadcast %77 : vector<2x16x1xf32> to vector<2x16x16xf32>
    %79 = arith.mulf %76, %78 : vector<2x16x16xf32>
    %80 = vector.shape_cast %79 : vector<2x16x16xf32> to vector<32x16xf32>
    %81 = arith.truncf %80 : vector<32x16xf32> to vector<32x16xbf16>
    %c0_36 = arith.constant 0 : index
    %c0_37 = arith.constant 0 : index
    %82 = vector.load %arg5[%c0_36, %c0_37] : memref<64x64xbf16, #tpu.memory_space<vmem>>, vector<16x64xbf16>
    %cst_38 = arith.constant dense<0.000000e+00> : vector<32x64xf32>
    %83 = tpu.matmul %81, %82, %cst_38 {dimension_numbers = #tpu.dot_dimension_numbers<[1], [0], [0], [1], [0, 0, 1, 1], [], []>} : vector<32x16xbf16>, vector<16x64xbf16>, vector<32x64xf32> -> vector<32x64xf32>
    %84 = arith.addf %60, %83 : vector<32x64xf32>
    %85 = vector.extract_strided_slice %59 {offsets = [0, 0, 16], sizes = [2, 16, 16], strides = [1, 1, 1]} : vector<2x16x192xf32> to vector<2x16x16xf32>
    %86 = arith.truncf %85 : vector<2x16x16xf32> to vector<2x16x16xbf16>
    %87 = vector.extract_strided_slice %59 {offsets = [0, 0, 80], sizes = [2, 16, 16], strides = [1, 1, 1]} : vector<2x16x192xf32> to vector<2x16x16xf32>
    %88 = arith.truncf %87 : vector<2x16x16xf32> to vector<2x16x16xbf16>
    %89 = vector.extract_strided_slice %59 {offsets = [0, 0, 144], sizes = [2, 16, 16], strides = [1, 1, 1]} : vector<2x16x192xf32> to vector<2x16x16xf32>
    %90 = arith.truncf %89 : vector<2x16x16xf32> to vector<2x16x16xbf16>
    "tpu.trace_start"() <{level = 10 : i32, message = "btd,bsd->bts"}> : () -> ()
    %cst_39 = arith.constant dense<0.000000e+00> : vector<2x16x16xf32>
    %91 = tpu.matmul %86, %88, %cst_39 {dimension_numbers = #tpu.dot_dimension_numbers<[2], [2], [1], [1], [0, 0, 0, 1, 1, 1], [0], [0]>} : vector<2x16x16xbf16>, vector<2x16x16xbf16>, vector<2x16x16xf32> -> vector<2x16x16xf32>
    "tpu.trace_stop"() : () -> ()
    %cst_40 = arith.constant dense<0xFF800000> : vector<2x16xf32>
    %92 = vector.multi_reduction <maximumf>, %91, %cst_40 [2] : vector<2x16x16xf32> to vector<2x16xf32>
    %93 = vector.shape_cast %92 : vector<2x16xf32> to vector<2x16x1xf32>
    %94 = vector.broadcast %93 : vector<2x16x1xf32> to vector<2x16x16xf32>
    %95 = arith.subf %91, %94 : vector<2x16x16xf32>
    %96 = math.exp %95 : vector<2x16x16xf32>
    %cst_41 = arith.constant dense<0.000000e+00> : vector<2x16xf32>
    %97 = vector.multi_reduction <add>, %96, %cst_41 [2] : vector<2x16x16xf32> to vector<2x16xf32>
    %98 = vector.shape_cast %97 : vector<2x16xf32> to vector<2x16x1xf32>
    %99 = arith.truncf %96 : vector<2x16x16xf32> to vector<2x16x16xbf16>
    "tpu.trace_start"() <{level = 10 : i32, message = "bts,bsd->btd"}> : () -> ()
    %cst_42 = arith.constant dense<0.000000e+00> : vector<2x16x16xf32>
    %100 = tpu.matmul %99, %90, %cst_42 {dimension_numbers = #tpu.dot_dimension_numbers<[2], [1], [1], [2], [0, 0, 0, 1, 1, 2], [0], [0]>} : vector<2x16x16xbf16>, vector<2x16x16xbf16>, vector<2x16x16xf32> -> vector<2x16x16xf32>
    "tpu.trace_stop"() : () -> ()
    %101 = tpu.reciprocal %98 {approx = true} : vector<2x16x1xf32> -> vector<2x16x1xf32>
    %102 = vector.broadcast %101 : vector<2x16x1xf32> to vector<2x16x16xf32>
    %103 = arith.mulf %100, %102 : vector<2x16x16xf32>
    %104 = vector.shape_cast %103 : vector<2x16x16xf32> to vector<32x16xf32>
    %105 = arith.truncf %104 : vector<32x16xf32> to vector<32x16xbf16>
    %c16 = arith.constant 16 : index
    %c0_43 = arith.constant 0 : index
    %106 = vector.load %arg5[%c16, %c0_43] : memref<64x64xbf16, #tpu.memory_space<vmem>>, vector<16x64xbf16>
    %cst_44 = arith.constant dense<0.000000e+00> : vector<32x64xf32>
    %107 = tpu.matmul %105, %106, %cst_44 {dimension_numbers = #tpu.dot_dimension_numbers<[1], [0], [0], [1], [0, 0, 1, 1], [], []>} : vector<32x16xbf16>, vector<16x64xbf16>, vector<32x64xf32> -> vector<32x64xf32>
    %108 = arith.addf %84, %107 : vector<32x64xf32>
    %109 = vector.extract_strided_slice %59 {offsets = [0, 0, 32], sizes = [2, 16, 16], strides = [1, 1, 1]} : vector<2x16x192xf32> to vector<2x16x16xf32>
    %110 = arith.truncf %109 : vector<2x16x16xf32> to vector<2x16x16xbf16>
    %111 = vector.extract_strided_slice %59 {offsets = [0, 0, 96], sizes = [2, 16, 16], strides = [1, 1, 1]} : vector<2x16x192xf32> to vector<2x16x16xf32>
    %112 = arith.truncf %111 : vector<2x16x16xf32> to vector<2x16x16xbf16>
    %113 = vector.extract_strided_slice %59 {offsets = [0, 0, 160], sizes = [2, 16, 16], strides = [1, 1, 1]} : vector<2x16x192xf32> to vector<2x16x16xf32>
    %114 = arith.truncf %113 : vector<2x16x16xf32> to vector<2x16x16xbf16>
    "tpu.trace_start"() <{level = 10 : i32, message = "btd,bsd->bts"}> : () -> ()
    %cst_45 = arith.constant dense<0.000000e+00> : vector<2x16x16xf32>
    %115 = tpu.matmul %110, %112, %cst_45 {dimension_numbers = #tpu.dot_dimension_numbers<[2], [2], [1], [1], [0, 0, 0, 1, 1, 1], [0], [0]>} : vector<2x16x16xbf16>, vector<2x16x16xbf16>, vector<2x16x16xf32> -> vector<2x16x16xf32>
    "tpu.trace_stop"() : () -> ()
    %cst_46 = arith.constant dense<0xFF800000> : vector<2x16xf32>
    %116 = vector.multi_reduction <maximumf>, %115, %cst_46 [2] : vector<2x16x16xf32> to vector<2x16xf32>
    %117 = vector.shape_cast %116 : vector<2x16xf32> to vector<2x16x1xf32>
    %118 = vector.broadcast %117 : vector<2x16x1xf32> to vector<2x16x16xf32>
    %119 = arith.subf %115, %118 : vector<2x16x16xf32>
    %120 = math.exp %119 : vector<2x16x16xf32>
    %cst_47 = arith.constant dense<0.000000e+00> : vector<2x16xf32>
    %121 = vector.multi_reduction <add>, %120, %cst_47 [2] : vector<2x16x16xf32> to vector<2x16xf32>
    %122 = vector.shape_cast %121 : vector<2x16xf32> to vector<2x16x1xf32>
    %123 = arith.truncf %120 : vector<2x16x16xf32> to vector<2x16x16xbf16>
    "tpu.trace_start"() <{level = 10 : i32, message = "bts,bsd->btd"}> : () -> ()
    %cst_48 = arith.constant dense<0.000000e+00> : vector<2x16x16xf32>
    %124 = tpu.matmul %123, %114, %cst_48 {dimension_numbers = #tpu.dot_dimension_numbers<[2], [1], [1], [2], [0, 0, 0, 1, 1, 2], [0], [0]>} : vector<2x16x16xbf16>, vector<2x16x16xbf16>, vector<2x16x16xf32> -> vector<2x16x16xf32>
    "tpu.trace_stop"() : () -> ()
    %125 = tpu.reciprocal %122 {approx = true} : vector<2x16x1xf32> -> vector<2x16x1xf32>
    %126 = vector.broadcast %125 : vector<2x16x1xf32> to vector<2x16x16xf32>
    %127 = arith.mulf %124, %126 : vector<2x16x16xf32>
    %128 = vector.shape_cast %127 : vector<2x16x16xf32> to vector<32x16xf32>
    %129 = arith.truncf %128 : vector<32x16xf32> to vector<32x16xbf16>
    %c32 = arith.constant 32 : index
    %c0_49 = arith.constant 0 : index
    %130 = vector.load %arg5[%c32, %c0_49] : memref<64x64xbf16, #tpu.memory_space<vmem>>, vector<16x64xbf16>
    %cst_50 = arith.constant dense<0.000000e+00> : vector<32x64xf32>
    %131 = tpu.matmul %129, %130, %cst_50 {dimension_numbers = #tpu.dot_dimension_numbers<[1], [0], [0], [1], [0, 0, 1, 1], [], []>} : vector<32x16xbf16>, vector<16x64xbf16>, vector<32x64xf32> -> vector<32x64xf32>
    %132 = arith.addf %108, %131 : vector<32x64xf32>
    %133 = vector.extract_strided_slice %59 {offsets = [0, 0, 48], sizes = [2, 16, 16], strides = [1, 1, 1]} : vector<2x16x192xf32> to vector<2x16x16xf32>
    %134 = arith.truncf %133 : vector<2x16x16xf32> to vector<2x16x16xbf16>
    %135 = vector.extract_strided_slice %59 {offsets = [0, 0, 112], sizes = [2, 16, 16], strides = [1, 1, 1]} : vector<2x16x192xf32> to vector<2x16x16xf32>
    %136 = arith.truncf %135 : vector<2x16x16xf32> to vector<2x16x16xbf16>
    %137 = vector.extract_strided_slice %59 {offsets = [0, 0, 176], sizes = [2, 16, 16], strides = [1, 1, 1]} : vector<2x16x192xf32> to vector<2x16x16xf32>
    %138 = arith.truncf %137 : vector<2x16x16xf32> to vector<2x16x16xbf16>
    "tpu.trace_start"() <{level = 10 : i32, message = "btd,bsd->bts"}> : () -> ()
    %cst_51 = arith.constant dense<0.000000e+00> : vector<2x16x16xf32>
    %139 = tpu.matmul %134, %136, %cst_51 {dimension_numbers = #tpu.dot_dimension_numbers<[2], [2], [1], [1], [0, 0, 0, 1, 1, 1], [0], [0]>} : vector<2x16x16xbf16>, vector<2x16x16xbf16>, vector<2x16x16xf32> -> vector<2x16x16xf32>
    "tpu.trace_stop"() : () -> ()
    %cst_52 = arith.constant dense<0xFF800000> : vector<2x16xf32>
    %140 = vector.multi_reduction <maximumf>, %139, %cst_52 [2] : vector<2x16x16xf32> to vector<2x16xf32>
    %141 = vector.shape_cast %140 : vector<2x16xf32> to vector<2x16x1xf32>
    %142 = vector.broadcast %141 : vector<2x16x1xf32> to vector<2x16x16xf32>
    %143 = arith.subf %139, %142 : vector<2x16x16xf32>
    %144 = math.exp %143 : vector<2x16x16xf32>
    %cst_53 = arith.constant dense<0.000000e+00> : vector<2x16xf32>
    %145 = vector.multi_reduction <add>, %144, %cst_53 [2] : vector<2x16x16xf32> to vector<2x16xf32>
    %146 = vector.shape_cast %145 : vector<2x16xf32> to vector<2x16x1xf32>
    %147 = arith.truncf %144 : vector<2x16x16xf32> to vector<2x16x16xbf16>
    "tpu.trace_start"() <{level = 10 : i32, message = "bts,bsd->btd"}> : () -> ()
    %cst_54 = arith.constant dense<0.000000e+00> : vector<2x16x16xf32>
    %148 = tpu.matmul %147, %138, %cst_54 {dimension_numbers = #tpu.dot_dimension_numbers<[2], [1], [1], [2], [0, 0, 0, 1, 1, 2], [0], [0]>} : vector<2x16x16xbf16>, vector<2x16x16xbf16>, vector<2x16x16xf32> -> vector<2x16x16xf32>
    "tpu.trace_stop"() : () -> ()
    %149 = tpu.reciprocal %146 {approx = true} : vector<2x16x1xf32> -> vector<2x16x1xf32>
    %150 = vector.broadcast %149 : vector<2x16x1xf32> to vector<2x16x16xf32>
    %151 = arith.mulf %148, %150 : vector<2x16x16xf32>
    %152 = vector.shape_cast %151 : vector<2x16x16xf32> to vector<32x16xf32>
    %153 = arith.truncf %152 : vector<32x16xf32> to vector<32x16xbf16>
    %c48 = arith.constant 48 : index
    %c0_55 = arith.constant 0 : index
    %154 = vector.load %arg5[%c48, %c0_55] : memref<64x64xbf16, #tpu.memory_space<vmem>>, vector<16x64xbf16>
    %cst_56 = arith.constant dense<0.000000e+00> : vector<32x64xf32>
    %155 = tpu.matmul %153, %154, %cst_56 {dimension_numbers = #tpu.dot_dimension_numbers<[1], [0], [0], [1], [0, 0, 1, 1], [], []>} : vector<32x16xbf16>, vector<16x64xbf16>, vector<32x64xf32> -> vector<32x64xf32>
    %156 = arith.addf %132, %155 : vector<32x64xf32>
    %157 = arith.addf %36, %156 : vector<32x64xf32>
    %c0_57 = arith.constant 0 : index
    %c0_58 = arith.constant 0 : index
    %158 = vector.load %arg9[%c0_57, %c0_58] : memref<1x64xf32, #tpu.memory_space<vmem>>, vector<1x64xf32>
    %159 = vector.broadcast %158 : vector<1x64xf32> to vector<32x64xf32>
    %160 = arith.addf %157, %159 : vector<32x64xf32>
    %cst_59 = arith.constant dense<0.000000e+00> : vector<32xf32>
    %161 = vector.multi_reduction <add>, %160, %cst_59 [1] : vector<32x64xf32> to vector<32xf32>
    %162 = vector.shape_cast %161 : vector<32xf32> to vector<32x1xf32>
    %cst_60 = arith.constant 6.400000e+01 : f32
    %163 = vector.broadcast %cst_60 : f32 to vector<32x1xf32>
    %164 = arith.divf %162, %163 : vector<32x1xf32>
    %165 = vector.broadcast %164 : vector<32x1xf32> to vector<32x64xf32>
    %166 = arith.subf %160, %165 : vector<32x64xf32>
    %167 = arith.mulf %166, %166 : vector<32x64xf32>
    %cst_61 = arith.constant dense<0.000000e+00> : vector<32xf32>
    %168 = vector.multi_reduction <add>, %167, %cst_61 [1] : vector<32x64xf32> to vector<32xf32>
    %169 = vector.shape_cast %168 : vector<32xf32> to vector<32x1xf32>
    %cst_62 = arith.constant 6.400000e+01 : f32
    %170 = vector.broadcast %cst_62 : f32 to vector<32x1xf32>
    %171 = arith.divf %169, %170 : vector<32x1xf32>
    %cst_63 = arith.constant 9.99999974E-6 : f32
    %172 = vector.broadcast %cst_63 : f32 to vector<32x1xf32>
    %173 = arith.addf %171, %172 : vector<32x1xf32>
    %174 = math.rsqrt %173 : vector<32x1xf32>
    %175 = vector.broadcast %174 : vector<32x1xf32> to vector<32x64xf32>
    %176 = arith.mulf %166, %175 : vector<32x64xf32>
    %c1 = arith.constant 1 : index
    %c0_64 = arith.constant 0 : index
    %c0_65 = arith.constant 0 : index
    %177 = vector.load %arg2[%c1, %c0_64, %c0_65] : memref<2x64x256xbf16, #tpu.memory_space<vmem>>, vector<1x64x256xbf16>
    %178 = vector.shape_cast %177 : vector<1x64x256xbf16> to vector<64x256xbf16>
    %c1_66 = arith.constant 1 : index
    %c0_67 = arith.constant 0 : index
    %c0_68 = arith.constant 0 : index
    %179 = vector.load %arg6[%c1_66, %c0_67, %c0_68] : memref<2x1x256xf32, #tpu.memory_space<vmem>>, vector<1x1x256xf32>
    %180 = vector.shape_cast %179 : vector<1x1x256xf32> to vector<1x256xf32>
    %c1_69 = arith.constant 1 : index
    %c0_70 = arith.constant 0 : index
    %c0_71 = arith.constant 0 : index
    %181 = vector.load %arg3[%c1_69, %c0_70, %c0_71] : memref<2x256x64xbf16, #tpu.memory_space<vmem>>, vector<1x256x64xbf16>
    %182 = vector.shape_cast %181 : vector<1x256x64xbf16> to vector<256x64xbf16>
    %c1_72 = arith.constant 1 : index
    %c0_73 = arith.constant 0 : index
    %c0_74 = arith.constant 0 : index
    %183 = vector.load %arg7[%c1_72, %c0_73, %c0_74] : memref<2x1x64xf32, #tpu.memory_space<vmem>>, vector<1x1x64xf32>
    %184 = vector.shape_cast %183 : vector<1x1x64xf32> to vector<1x64xf32>
    %185 = arith.truncf %176 : vector<32x64xf32> to vector<32x64xbf16>
    %cst_75 = arith.constant dense<0.000000e+00> : vector<32x256xf32>
    %186 = tpu.matmul %185, %178, %cst_75 {dimension_numbers = #tpu.dot_dimension_numbers<[1], [0], [0], [1], [0, 0, 1, 1], [], []>} : vector<32x64xbf16>, vector<64x256xbf16>, vector<32x256xf32> -> vector<32x256xf32>
    %187 = vector.broadcast %180 : vector<1x256xf32> to vector<32x256xf32>
    %188 = arith.addf %186, %187 : vector<32x256xf32>
    %cst_76 = arith.constant 0.000000e+00 : f32
    %189 = vector.broadcast %cst_76 : f32 to vector<32x256xf32>
    %190 = arith.maximumf %188, %189 : vector<32x256xf32>
    %191 = arith.truncf %190 : vector<32x256xf32> to vector<32x256xbf16>
    %cst_77 = arith.constant dense<0.000000e+00> : vector<32x64xf32>
    %192 = tpu.matmul %191, %182, %cst_77 {dimension_numbers = #tpu.dot_dimension_numbers<[1], [0], [0], [1], [0, 0, 1, 1], [], []>} : vector<32x256xbf16>, vector<256x64xbf16>, vector<32x64xf32> -> vector<32x64xf32>
    %193 = vector.broadcast %184 : vector<1x64xf32> to vector<32x64xf32>
    %194 = arith.addf %192, %193 : vector<32x64xf32>
    %195 = arith.addf %160, %194 : vector<32x64xf32>
    %196 = vector.shape_cast %195 : vector<32x64xf32> to vector<2x16x64xf32>
    %c0_78 = arith.constant 0 : index
    %c0_79 = arith.constant 0 : index
    %c0_80 = arith.constant 0 : index
    %197 = vector.load %arg10[%c0_78, %c0_79, %c0_80] : memref<2x16x64xf32, #tpu.memory_space<vmem>>, vector<2x16x64xf32>
    tpu.vector_store %arg10[%c0_78, %c0_79, %c0_80], %196 {strides = array<i32>} : memref<2x16x64xf32, #tpu.memory_space<vmem>>, vector<2x16x64xf32>,
    return
  }
  func.func @transform_0(%arg0: i32) -> (i32, i32, i32) {
    %c0_i32 = arith.constant 0 : i32
    %c0_i32_0 = arith.constant 0 : i32
    %c0_i32_1 = arith.constant 0 : i32
    return %arg0, %c0_i32, %c0_i32_0 : i32, i32, i32
  }
  func.func @transform_1(%arg0: i32) -> (i32, i32, i32) {
    %c0_i32 = arith.constant 0 : i32
    %c0_i32_0 = arith.constant 0 : i32
    %c0_i32_1 = arith.constant 0 : i32
    %c0_i32_2 = arith.constant 0 : i32
    return %c0_i32, %c0_i32_0, %c0_i32_1 : i32, i32, i32
  }
  func.func @transform_2(%arg0: i32) -> (i32, i32, i32) {
    %c0_i32 = arith.constant 0 : i32
    %c0_i32_0 = arith.constant 0 : i32
    %c0_i32_1 = arith.constant 0 : i32
    %c0_i32_2 = arith.constant 0 : i32
    return %c0_i32, %c0_i32_0, %c0_i32_1 : i32, i32, i32
  }
  func.func @transform_3(%arg0: i32) -> (i32, i32) {
    %c0_i32 = arith.constant 0 : i32
    %c0_i32_0 = arith.constant 0 : i32
    %c0_i32_1 = arith.constant 0 : i32
    return %c0_i32, %c0_i32_0 : i32, i32
  }
  func.func @transform_4(%arg0: i32) -> (i32, i32) {
    %c0_i32 = arith.constant 0 : i32
    %c0_i32_0 = arith.constant 0 : i32
    %c0_i32_1 = arith.constant 0 : i32
    return %c0_i32, %c0_i32_0 : i32, i32
  }
  func.func @transform_5(%arg0: i32) -> (i32, i32, i32) {
    %c0_i32 = arith.constant 0 : i32
    %c0_i32_0 = arith.constant 0 : i32
    %c0_i32_1 = arith.constant 0 : i32
    %c0_i32_2 = arith.constant 0 : i32
    return %c0_i32, %c0_i32_0, %c0_i32_1 : i32, i32, i32
  }
  func.func @transform_6(%arg0: i32) -> (i32, i32, i32) {
    %c0_i32 = arith.constant 0 : i32
    %c0_i32_0 = arith.constant 0 : i32
    %c0_i32_1 = arith.constant 0 : i32
    %c0_i32_2 = arith.constant 0 : i32
    return %c0_i32, %c0_i32_0, %c0_i32_1 : i32, i32, i32
  }
  func.func @transform_7(%arg0: i32) -> (i32, i32) {
    %c0_i32 = arith.constant 0 : i32
    %c0_i32_0 = arith.constant 0 : i32
    %c0_i32_1 = arith.constant 0 : i32
    return %c0_i32, %c0_i32_0 : i32, i32
  }
  func.func @transform_8(%arg0: i32) -> (i32, i32) {
    %c0_i32 = arith.constant 0 : i32
    %c0_i32_0 = arith.constant 0 : i32
    %c0_i32_1 = arith.constant 0 : i32
    return %c0_i32, %c0_i32_0 : i32, i32
  }
  func.func @transform_9(%arg0: i32) -> (i32, i32, i32) {
    %c0_i32 = arith.constant 0 : i32
    %c0_i32_0 = arith.constant 0 : i32
    %c0_i32_1 = arith.constant 0 : i32
    return %arg0, %c0_i32, %c0_i32_0 : i32, i32, i32
  }
}

</mosaic_0001>

<llo_original>
// kernel: tpu_custom_call.1
$region0: #{tpu_custom_call.1}
  #allocation0 [shape = 'u32[]', space=smem, size = 0x4, offset = 0x4, fixed_abs, tag = 'smem constant byte address 0x4 - core index']
  #allocation1 [shape = 'u32[144,128]{1,0:T(1,128)}', space=vmem, size = 0x12000, scoped, tag = 'internal scratch']
  %s0 = inlined_call_operand.vmem [shape: f32[2,16,64], index: 0, kind: input, shape index: {}]
  %s1 = inlined_call_operand.vmem [shape: bf16[2,64,256], index: 1, kind: input, shape index: {}]
  %s2 = inlined_call_operand.vmem [shape: bf16[2,256,64], index: 2, kind: input, shape index: {}]
  %s3 = inlined_call_operand.vmem [shape: bf16[64,192], index: 3, kind: input, shape index: {}]
  %s4 = inlined_call_operand.vmem [shape: bf16[64,64], index: 4, kind: input, shape index: {}]
  %s5 = inlined_call_operand.vmem [shape: f32[2,1,256], index: 5, kind: input, shape index: {}]
  %s6 = inlined_call_operand.vmem [shape: f32[2,1,64], index: 6, kind: input, shape index: {}]
  %s7 = inlined_call_operand.vmem [shape: f32[1,192], index: 7, kind: input, shape index: {}]
  %s8 = inlined_call_operand.vmem [shape: f32[1,64], index: 8, kind: input, shape index: {}]
  %s9 = inlined_call_operand.hbm [shape: f32[2,16,64], index: 9, kind: output, shape index: {}]
  %s10 = sld [smem:[#allocation0]]
  $region46: #{tpu_custom_call.1} parent=0
    _
  %s12 = ssub.s32 1, %s10
  %s13 = scalar_select 0, %s12, %s10
  $region1: #{tpu_custom_call.1} parent=0
    #allocation2 [shape = 'u8[16384]{0}', space=vmem, size = 0x4000, scoped, tag = 'output window, operand 0, single buffered']
    #allocation3 [shape = 's32[1]{0}', space=sflag, size = 0x4, scoped, tag = 'scoped memory for tpu_custom_call.1']
    %14 = vsyncpa [#allocation3], 0
    // Predicated region
    $region2: #{tpu_custom_call.1} parent=1 // pred_check
      _
    $region3: #{tpu_custom_call.1} parent=1 // pred_check_branch
      %16 = sbr.rel (0) target = $region5
    $region4: #{tpu_custom_call.1} parent=1 // pred_region
      _
    $region5: #{tpu_custom_call.1} parent=1 // pred_fallthru
      _
    // Predicated region
    $region6: #{tpu_custom_call.1} parent=1 // pred_check
      _
    $region7: #{tpu_custom_call.1} parent=1 // pred_check_branch
      %18 = sbr.rel (0) target = $region9
    $region8: #{tpu_custom_call.1} parent=1 // pred_region
      _
    $region9: #{tpu_custom_call.1} parent=1 // pred_fallthru
      _
    // Predicated region
    $region10: #{tpu_custom_call.1} parent=1 // pred_check
      _
    $region11: #{tpu_custom_call.1} parent=1 // pred_check_branch
      %20 = sbr.rel (0) target = $region13
    $region12: #{tpu_custom_call.1} parent=1 // pred_region
      _
    $region13: #{tpu_custom_call.1} parent=1 // pred_fallthru
      _
    // Predicated region
    $region14: #{tpu_custom_call.1} parent=1 // pred_check
      _
    $region15: #{tpu_custom_call.1} parent=1 // pred_check_branch
      %22 = sbr.rel (0) target = $region17
    $region16: #{tpu_custom_call.1} parent=1 // pred_region
      _
    $region17: #{tpu_custom_call.1} parent=1 // pred_fallthru
      _
    // Predicated region
    $region18: #{tpu_custom_call.1} parent=1 // pred_check
      _
    $region19: #{tpu_custom_call.1} parent=1 // pred_check_branch
      %24 = sbr.rel (0) target = $region21
    $region20: #{tpu_custom_call.1} parent=1 // pred_region
      _
    $region21: #{tpu_custom_call.1} parent=1 // pred_fallthru
      _
    // Predicated region
    $region22: #{tpu_custom_call.1} parent=1 // pred_check
      _
    $region23: #{tpu_custom_call.1} parent=1 // pred_check_branch
      %26 = sbr.rel (0) target = $region25
    $region24: #{tpu_custom_call.1} parent=1 // pred_region
      _
    $region25: #{tpu_custom_call.1} parent=1 // pred_fallthru
      _
    // Predicated region
    $region26: #{tpu_custom_call.1} parent=1 // pred_check
      _
    $region27: #{tpu_custom_call.1} parent=1 // pred_check_branch
      %28 = sbr.rel (0) target = $region29
    $region28: #{tpu_custom_call.1} parent=1 // pred_region
      _
    $region29: #{tpu_custom_call.1} parent=1 // pred_fallthru
      _
    // Predicated region
    $region30: #{tpu_custom_call.1} parent=1 // pred_check
      _
    $region31: #{tpu_custom_call.1} parent=1 // pred_check_branch
      %30 = sbr.rel (0) target = $region33
    $region32: #{tpu_custom_call.1} parent=1 // pred_region
      _
    $region33: #{tpu_custom_call.1} parent=1 // pred_fallthru
      _
    // Predicated region
    $region34: #{tpu_custom_call.1} parent=1 // pred_check
      _
    $region35: #{tpu_custom_call.1} parent=1 // pred_check_branch
      %32 = sbr.rel (0) target = $region37
    $region36: #{tpu_custom_call.1} parent=1 // pred_region
      _
    $region37: #{tpu_custom_call.1} parent=1 // pred_fallthru
      _
    %v34 = vld [vmem:[%s0] sm:$0xff]
    %v35 = vld [vmem:[%s0 + $0x8] sm:$0xff]
    %v36 = vld [vmem:[%s0 + $0x10] sm:$0xff]
    %v37 = vld [vmem:[%s0 + $0x18] sm:$0xff]
    %vm38 = vcmask 523264
    %v39 = vsel %vm38, %v34, 0.0
    %40 = vadd.xlane.f32.xlu0 %v39
    %v41 = vpop.xlane.xlu0 %40
    %v42 = vsel %vm38, %v35, 0.0
    %43 = vadd.xlane.f32.xlu0 %v42
    %v44 = vpop.xlane.xlu0 %43
    %v45 = vsel %vm38, %v36, 0.0
    %46 = vadd.xlane.f32.xlu0 %v45
    %v47 = vpop.xlane.xlu0 %46
    %v48 = vsel %vm38, %v37, 0.0
    %49 = vadd.xlane.f32.xlu0 %v48
    %v50 = vpop.xlane.xlu0 %49
    %v51 = vrcp.pop 64.0
    %v52 = vmul.f32 %v41, %v51
    %v53 = vmul.f32 %v44, %v51
    %v54 = vmul.f32 %v47, %v51
    %v55 = vmul.f32 %v50, %v51
    %v56 = vsub.f32 %v34, %v52
    %v57 = vsub.f32 %v35, %v53
    %v58 = vsub.f32 %v36, %v54
    %v59 = vsub.f32 %v37, %v55
    %v60 = vmul.f32 %v56, %v56
    %v61 = vmul.f32 %v57, %v57
    %v62 = vmul.f32 %v58, %v58
    %v63 = vmul.f32 %v59, %v59
    %v64 = vsel %vm38, %v60, 0.0
    %65 = vadd.xlane.f32.xlu0 %v64
    %v66 = vpop.xlane.xlu0 %65
    %v67 = vsel %vm38, %v61, 0.0
    %68 = vadd.xlane.f32.xlu0 %v67
    %v69 = vpop.xlane.xlu0 %68
    %v70 = vsel %vm38, %v62, 0.0
    %71 = vadd.xlane.f32.xlu0 %v70
    %v72 = vpop.xlane.xlu0 %71
    %v73 = vsel %vm38, %v63, 0.0
    %74 = vadd.xlane.f32.xlu0 %v73
    %v75 = vpop.xlane.xlu0 %74
    %v76 = vmul.f32 %v66, %v51
    %v77 = vmul.f32 %v69, %v51
    %v78 = vmul.f32 %v72, %v51
    %v79 = vmul.f32 %v75, %v51
    %v80 = vadd.f32 %v76, 1e-05
    %v81 = vadd.f32 %v77, 1e-05
    %v82 = vadd.f32 %v78, 1e-05
    %v83 = vadd.f32 %v79, 1e-05
    %v84 = vrsqrt.pop %v80
    %v85 = vrsqrt.pop %v81
    %v86 = vrsqrt.pop %v82
    %v87 = vrsqrt.pop %v83
    %v88 = vmul.f32 %v56, %v84
    %v89 = vmul.f32 %v57, %v85
    %v90 = vmul.f32 %v58, %v86
    %v91 = vmul.f32 %v59, %v87
    %v92 = vld [vmem:[%s1] sm:$0xff]
    %v93 = vld [vmem:[%s1 + $0x8] sm:$0xff]
    %v94 = vld [vmem:[%s1 + $0x10] sm:$0xff]
    %v95 = vld [vmem:[%s1 + $0x18] sm:$0xff]
    %v96 = vld [vmem:[%s1 + $0x20] sm:$0xff]
    %v97 = vld [vmem:[%s1 + $0x28] sm:$0xff]
    %v98 = vld [vmem:[%s1 + $0x30] sm:$0xff]
    %v99 = vld [vmem:[%s1 + $0x38] sm:$0xff]
    %v100 = vld [vmem:[%s5] sm:$0x3]
    %v101 = vld [vmem:[%s2] sm:$0xf]
    %v102 = vld [vmem:[%s2 + $0x4] sm:$0xf]
    %v103 = vld [vmem:[%s2 + $0x8] sm:$0xf]
    %v104 = vld [vmem:[%s2 + $0xc] sm:$0xf]
    %v105 = vld [vmem:[%s2 + $0x10] sm:$0xf]
    %v106 = vld [vmem:[%s2 + $0x14] sm:$0xf]
    %v107 = vld [vmem:[%s2 + $0x18] sm:$0xf]
    %v108 = vld [vmem:[%s2 + $0x1c] sm:$0xf]
    %v109 = vld [vmem:[%s2 + $0x20] sm:$0xf]
    %v110 = vld [vmem:[%s2 + $0x24] sm:$0xf]
    %v111 = vld [vmem:[%s2 + $0x28] sm:$0xf]
    %v112 = vld [vmem:[%s2 + $0x2c] sm:$0xf]
    %v113 = vld [vmem:[%s2 + $0x30] sm:$0xf]
    %v114 = vld [vmem:[%s2 + $0x34] sm:$0xf]
    %v115 = vld [vmem:[%s2 + $0x38] sm:$0xf]
    %v116 = vld [vmem:[%s2 + $0x3c] sm:$0xf]
    %v117 = vld [vmem:[%s2 + $0x40] sm:$0xf]
    %v118 = vld [vmem:[%s2 + $0x44] sm:$0xf]
    %v119 = vld [vmem:[%s2 + $0x48] sm:$0xf]
    %v120 = vld [vmem:[%s2 + $0x4c] sm:$0xf]
    %v121 = vld [vmem:[%s2 + $0x50] sm:$0xf]
    %v122 = vld [vmem:[%s2 + $0x54] sm:$0xf]
    %v123 = vld [vmem:[%s2 + $0x58] sm:$0xf]
    %v124 = vld [vmem:[%s2 + $0x5c] sm:$0xf]
    %v125 = vld [vmem:[%s2 + $0x60] sm:$0xf]
    %v126 = vld [vmem:[%s2 + $0x64] sm:$0xf]
    %v127 = vld [vmem:[%s2 + $0x68] sm:$0xf]
    %v128 = vld [vmem:[%s2 + $0x6c] sm:$0xf]
    %v129 = vld [vmem:[%s2 + $0x70] sm:$0xf]
    %v130 = vld [vmem:[%s2 + $0x74] sm:$0xf]
    %v131 = vld [vmem:[%s2 + $0x78] sm:$0xf]
    %v132 = vld [vmem:[%s2 + $0x7c] sm:$0xf]
    %v133 = vld [vmem:[%s6] sm:$0x1]
    %v134 = vpack.c.bf16 %v89, %v88
    %v135 = vpack.c.bf16 %v91, %v90
    %v137 = vlaneseq
    %v138 = vshrl.u32 %v137, 7
    %v139 = vsub.s32 0, %v138
    %v140 = vrot.slane %v100, %v139
    %v141 = vlaneseq
    %v142 = vshrl.u32 %v141, 7
    %v143 = vsub.s32 1, %v142
    %v144 = vrot.slane %v100, %v143
    %v155 = vunpack.c.l.b16 %v92
    %v156 = vunpack.c.h.b16 %v92
    %v157 = vunpack.c.l.b16 %v93
    %v158 = vunpack.c.h.b16 %v93
    %v159 = vunpack.c.l.b16 %v94
    %v160 = vunpack.c.h.b16 %v94
    %v161 = vunpack.c.l.b16 %v95
    %v162 = vunpack.c.h.b16 %v95
    %v163 = vunpack.c.l.b16 %v96
    %v164 = vunpack.c.h.b16 %v96
    %v165 = vunpack.c.l.b16 %v97
    %v166 = vunpack.c.h.b16 %v97
    %v167 = vunpack.c.l.b16 %v98
    %v168 = vunpack.c.h.b16 %v98
    %v169 = vunpack.c.l.b16 %v99
    %v170 = vunpack.c.h.b16 %v99
    %v171 = vpack.c.b16 %v157, %v155
    %v172 = vpack.c.b16 %v158, %v156
    %v173 = vpack.c.b16 %v161, %v159
    %v174 = vpack.c.b16 %v162, %v160
    %v175 = vpack.c.b16 %v165, %v163
    %v176 = vpack.c.b16 %v166, %v164
    %v177 = vpack.c.b16 %v169, %v167
    %v178 = vpack.c.b16 %v170, %v168
    %v188 = vsel %vm38, %v134, 0
    %v191 = vsel %vm38, %v135, 0
    %193 = vmatprep.subr.bf16.mxu0 0
    %194 = vmatpush1.bf16.msra.mxu0 0
    %195 = vmatprep.subr.bf16.mxu0 0
    %196 = vmatpush1.bf16.msra.mxu0 0
    %197 = vmatprep.subr.bf16.mxu0 0
    %198 = vmatpush1.bf16.msra.mxu0 0
    %199 = vmatprep.subr.bf16.mxu0 0
    %200 = vmatpush1.bf16.msra.mxu0 0
    %201 = vmatprep.subr.bf16.mxu0 %v178
    %202 = vmatpush1.bf16.msra.mxu0 %v177
    %203 = vmatprep.subr.bf16.mxu0 %v176
    %204 = vmatpush1.bf16.msra.mxu0 %v175
    %205 = vmatprep.subr.bf16.mxu0 %v174
    %206 = vmatpush1.bf16.msra.mxu0 %v173
    %207 = vmatprep.subr.bf16.mxu0 %v172
    %208 = vmatpush1.bf16.msra.mxu0 %v171
    %209 = vmatprep.subr.bf16.mxu0 0
    %210 = vmatpush2.bf16.msra.mxu0 0
    %211 = vmatprep.subr.bf16.mxu0 0
    %212 = vmatpush2.bf16.msra.mxu0 0
    %213 = vmatprep.subr.bf16.mxu0 0
    %214 = vmatpush2.bf16.msra.mxu0 0
    %215 = vmatprep.subr.bf16.mxu0 0
    %216 = vmatpush2.bf16.msra.mxu0 0
    %217 = vmatprep.subr.bf16.mxu0 0
    %218 = vmatpush2.bf16.msra.mxu0 0
    %219 = vmatprep.subr.bf16.mxu0 0
    %220 = vmatpush2.bf16.msra.mxu0 0
    %221 = vmatprep.subr.bf16.mxu0 0
    %222 = vmatpush2.bf16.msra.mxu0 0
    %223 = vmatprep.subr.bf16.mxu0 0
    %224 = vmatpush2.bf16.msra.mxu0 0
    %225 = vmatprep.mubr.bf16.mxu0 0
    %226 = vmatmul.mubr.bf16.gmra.mxu0 %v188
    %v227 = vpop.f32.mrf.mxu0
    %v228 = vadd.f32 %v140, %v227
    %v229 = vpop.f32.mrf.mxu0
    %v230 = vadd.f32 %v144, %v229
    %v231 = vpop.f32.mrf.mxu0
    %v232 = vadd.f32 %v140, %v231
    %v233 = vpop.f32.mrf.mxu0
    %v234 = vadd.f32 %v144, %v233
    %235 = vmatprep.mubr.bf16.mxu0 0
    %236 = vmatmul.mubr.bf16.gmra.mxu0 %v191
    %v237 = vpop.f32.mrf.mxu0
    %v238 = vadd.f32 %v140, %v237
    %v239 = vpop.f32.mrf.mxu0
    %v240 = vadd.f32 %v144, %v239
    %v241 = vpop.f32.mrf.mxu0
    %v242 = vadd.f32 %v140, %v241
    %v243 = vpop.f32.mrf.mxu0
    %v244 = vadd.f32 %v144, %v243
    %245 = vdwg.mxu0
    %v246 = vmax.f32 %v228, 0.0
    %v247 = vmax.f32 %v230, 0.0
    %v248 = vmax.f32 %v232, 0.0
    %v249 = vmax.f32 %v234, 0.0
    %v250 = vmax.f32 %v238, 0.0
    %v251 = vmax.f32 %v240, 0.0
    %v252 = vmax.f32 %v242, 0.0
    %v253 = vmax.f32 %v244, 0.0
    %v254 = vpack.c.bf16 %v248, %v246
    %v255 = vpack.c.bf16 %v249, %v247
    %v256 = vpack.c.bf16 %v252, %v250
    %v257 = vpack.c.bf16 %v253, %v251
    %v259 = vlaneseq
    %v260 = vshrl.u32 %v259, 7
    %v261 = vsub.s32 0, %v260
    %v262 = vrot.slane %v133, %v261
    %v296 = vunpack.c.l.b16 %v101
    %v297 = vunpack.c.l.b16 %v102
    %v298 = vunpack.c.l.b16 %v103
    %v299 = vunpack.c.l.b16 %v104
    %v300 = vunpack.c.l.b16 %v105
    %v301 = vunpack.c.l.b16 %v106
    %v302 = vunpack.c.l.b16 %v107
    %v303 = vunpack.c.l.b16 %v108
    %v304 = vunpack.c.l.b16 %v109
    %v305 = vunpack.c.l.b16 %v110
    %v306 = vunpack.c.l.b16 %v111
    %v307 = vunpack.c.l.b16 %v112
    %v308 = vunpack.c.l.b16 %v113
    %v309 = vunpack.c.l.b16 %v114
    %v310 = vunpack.c.l.b16 %v115
    %v311 = vunpack.c.l.b16 %v116
    %v312 = vunpack.c.l.b16 %v117
    %v313 = vunpack.c.l.b16 %v118
    %v314 = vunpack.c.l.b16 %v119
    %v315 = vunpack.c.l.b16 %v120
    %v316 = vunpack.c.l.b16 %v121
    %v317 = vunpack.c.l.b16 %v122
    %v318 = vunpack.c.l.b16 %v123
    %v319 = vunpack.c.l.b16 %v124
    %v320 = vunpack.c.l.b16 %v125
    %v321 = vunpack.c.l.b16 %v126
    %v322 = vunpack.c.l.b16 %v127
    %v323 = vunpack.c.l.b16 %v128
    %v324 = vunpack.c.l.b16 %v129
    %v325 = vunpack.c.l.b16 %v130
    %v326 = vunpack.c.l.b16 %v131
    %v327 = vunpack.c.l.b16 %v132
    %v328 = vpack.c.b16 %v297, %v296
    %v329 = vpack.c.b16 %v299, %v298
    %v330 = vpack.c.b16 %v301, %v300
    %v331 = vpack.c.b16 %v303, %v302
    %v332 = vpack.c.b16 %v305, %v304
    %v333 = vpack.c.b16 %v307, %v306
    %v334 = vpack.c.b16 %v309, %v308
    %v335 = vpack.c.b16 %v311, %v310
    %v336 = vpack.c.b16 %v313, %v312
    %v337 = vpack.c.b16 %v315, %v314
    %v338 = vpack.c.b16 %v317, %v316
    %v339 = vpack.c.b16 %v319, %v318
    %v340 = vpack.c.b16 %v321, %v320
    %v341 = vpack.c.b16 %v323, %v322
    %v342 = vpack.c.b16 %v325, %v324
    %v343 = vpack.c.b16 %v327, %v326
    %360 = vmatprep.subr.bf16.mxu0 0
    %361 = vmatpush1.bf16.msra.mxu0 %v335
    %362 = vmatprep.subr.bf16.mxu0 0
    %363 = vmatpush1.bf16.msra.mxu0 %v334
    %364 = vmatprep.subr.bf16.mxu0 0
    %365 = vmatpush1.bf16.msra.mxu0 %v333
    %366 = vmatprep.subr.bf16.mxu0 0
    %367 = vmatpush1.bf16.msra.mxu0 %v332
    %368 = vmatprep.subr.bf16.mxu0 0
    %369 = vmatpush1.bf16.msra.mxu0 %v331
    %370 = vmatprep.subr.bf16.mxu0 0
    %371 = vmatpush1.bf16.msra.mxu0 %v330
    %372 = vmatprep.subr.bf16.mxu0 0
    %373 = vmatpush1.bf16.msra.mxu0 %v329
    %374 = vmatprep.subr.bf16.mxu0 0
    %375 = vmatpush1.bf16.msra.mxu0 %v328
    %376 = vmatprep.subr.bf16.mxu0 0
    %377 = vmatpush2.bf16.msra.mxu0 %v343
    %378 = vmatprep.subr.bf16.mxu0 0
    %379 = vmatpush2.bf16.msra.mxu0 %v342
    %380 = vmatprep.subr.bf16.mxu0 0
    %381 = vmatpush2.bf16.msra.mxu0 %v341
    %382 = vmatprep.subr.bf16.mxu0 0
    %383 = vmatpush2.bf16.msra.mxu0 %v340
    %384 = vmatprep.subr.bf16.mxu0 0
    %385 = vmatpush2.bf16.msra.mxu0 %v339
    %386 = vmatprep.subr.bf16.mxu0 0
    %387 = vmatpush2.bf16.msra.mxu0 %v338
    %388 = vmatprep.subr.bf16.mxu0 0
    %389 = vmatpush2.bf16.msra.mxu0 %v337
    %390 = vmatprep.subr.bf16.mxu0 0
    %391 = vmatpush2.bf16.msra.mxu0 %v336
    %392 = vmatprep.mubr.bf16.mxu0 %v255
    %393 = vmatmul.mubr.bf16.gmra.mxu0 %v254
    %v394 = vpop.f32.mrf.mxu0
    %v395 = vadd.f32 %v262, %v394
    %v396 = vpop.f32.mrf.mxu0
    %v397 = vpop.f32.mrf.mxu0
    %v398 = vadd.f32 %v262, %v397
    %v399 = vpop.f32.mrf.mxu0
    %400 = vmatprep.mubr.bf16.mxu0 %v257
    %401 = vmatmul.mubr.bf16.gmra.mxu0 %v256
    %v402 = vpop.f32.mrf.mxu0
    %v403 = vadd.f32 %v262, %v402
    %v404 = vpop.f32.mrf.mxu0
    %v405 = vpop.f32.mrf.mxu0
    %v406 = vadd.f32 %v262, %v405
    %v407 = vpop.f32.mrf.mxu0
    %408 = vdwg.mxu0
    %v409 = vadd.f32 %v34, %v395
    %v410 = vadd.f32 %v35, %v398
    %v411 = vadd.f32 %v36, %v403
    %v412 = vadd.f32 %v37, %v406
    %v413 = vsel %vm38, %v409, 0.0
    %414 = vadd.xlane.f32.xlu0 %v413
    %v415 = vpop.xlane.xlu0 %414
    %v416 = vsel %vm38, %v410, 0.0
    %417 = vadd.xlane.f32.xlu0 %v416
    %v418 = vpop.xlane.xlu0 %417
    %v419 = vsel %vm38, %v411, 0.0
    %420 = vadd.xlane.f32.xlu0 %v419
    %v421 = vpop.xlane.xlu0 %420
    %v422 = vsel %vm38, %v412, 0.0
    %423 = vadd.xlane.f32.xlu0 %v422
    %v424 = vpop.xlane.xlu0 %423
    %v425 = vmul.f32 %v415, %v51
    %v426 = vmul.f32 %v418, %v51
    %v427 = vmul.f32 %v421, %v51
    %v428 = vmul.f32 %v424, %v51
    %v429 = vsub.f32 %v409, %v425
    %v430 = vsub.f32 %v410, %v426
    %v431 = vsub.f32 %v411, %v427
    %v432 = vsub.f32 %v412, %v428
    %v433 = vmul.f32 %v429, %v429
    %v434 = vmul.f32 %v430, %v430
    %v435 = vmul.f32 %v431, %v431
    %v436 = vmul.f32 %v432, %v432
    %v437 = vsel %vm38, %v433, 0.0
    %438 = vadd.xlane.f32.xlu0 %v437
    %v439 = vpop.xlane.xlu0 %438
    %v440 = vsel %vm38, %v434, 0.0
    %441 = vadd.xlane.f32.xlu0 %v440
    %v442 = vpop.xlane.xlu0 %441
    %v443 = vsel %vm38, %v435, 0.0
    %444 = vadd.xlane.f32.xlu0 %v443
    %v445 = vpop.xlane.xlu0 %444
    %v446 = vsel %vm38, %v436, 0.0
    %447 = vadd.xlane.f32.xlu0 %v446
    %v448 = vpop.xlane.xlu0 %447
    %v449 = vmul.f32 %v439, %v51
    %v450 = vmul.f32 %v442, %v51
    %v451 = vmul.f32 %v445, %v51
    %v452 = vmul.f32 %v448, %v51
    %v453 = vadd.f32 %v449, 1e-05
    %v454 = vadd.f32 %v450, 1e-05
    %v455 = vadd.f32 %v451, 1e-05
    %v456 = vadd.f32 %v452, 1e-05
    %v457 = vrsqrt.pop %v453
    %v458 = vrsqrt.pop %v454
    %v459 = vrsqrt.pop %v455
    %v460 = vrsqrt.pop %v456
    %v461 = vmul.f32 %v429, %v457
    %v462 = vmul.f32 %v430, %v458
    %v463 = vmul.f32 %v431, %v459
    %v464 = vmul.f32 %v432, %v460
    %v465 = vpack.c.bf16 %v462, %v461
    %v466 = vpack.c.bf16 %v464, %v463
    %v467 = vld [vmem:[%s3] sm:$0xff]
    %v468 = vld [vmem:[%s3 + $0x8] sm:$0xff]
    %v469 = vld [vmem:[%s3 + $0x10] sm:$0xff]
    %v470 = vld [vmem:[%s3 + $0x18] sm:$0xff]
    %v471 = vld [vmem:[%s3 + $0x20] sm:$0xff]
    %v472 = vld [vmem:[%s3 + $0x28] sm:$0xff]
    %v473 = vld [vmem:[%s3 + $0x30] sm:$0xff]
    %v474 = vld [vmem:[%s3 + $0x38] sm:$0xff]
    %v475 = vld [vmem:[%s7] sm:$0x3]
    %v477 = vlaneseq
    %v478 = vshrl.u32 %v477, 7
    %v479 = vsub.s32 0, %v478
    %v480 = vrot.slane %v475, %v479
    %v481 = vlaneseq
    %v482 = vshrl.u32 %v481, 7
    %v483 = vsub.s32 1, %v482
    %v484 = vrot.slane %v475, %v483
    %v495 = vunpack.c.l.b16 %v467
    %v496 = vunpack.c.h.b16 %v467
    %v497 = vunpack.c.l.b16 %v468
    %v498 = vunpack.c.h.b16 %v468
    %v499 = vunpack.c.l.b16 %v469
    %v500 = vunpack.c.h.b16 %v469
    %v501 = vunpack.c.l.b16 %v470
    %v502 = vunpack.c.h.b16 %v470
    %v503 = vunpack.c.l.b16 %v471
    %v504 = vunpack.c.h.b16 %v471
    %v505 = vunpack.c.l.b16 %v472
    %v506 = vunpack.c.h.b16 %v472
    %v507 = vunpack.c.l.b16 %v473
    %v508 = vunpack.c.h.b16 %v473
    %v509 = vunpack.c.l.b16 %v474
    %v510 = vunpack.c.h.b16 %v474
    %v511 = vpack.c.b16 %v497, %v495
    %v512 = vpack.c.b16 %v498, %v496
    %v513 = vpack.c.b16 %v501, %v499
    %v514 = vpack.c.b16 %v502, %v500
    %v515 = vpack.c.b16 %v505, %v503
    %v516 = vpack.c.b16 %v506, %v504
    %v517 = vpack.c.b16 %v509, %v507
    %v518 = vpack.c.b16 %v510, %v508
    %v528 = vsel %vm38, %v465, 0
    %v531 = vsel %vm38, %v466, 0
    %533 = vmatprep.subr.bf16.mxu0 0
    %534 = vmatpush1.bf16.msra.mxu0 0
    %535 = vmatprep.subr.bf16.mxu0 0
    %536 = vmatpush1.bf16.msra.mxu0 0
    %537 = vmatprep.subr.bf16.mxu0 0
    %538 = vmatpush1.bf16.msra.mxu0 0
    %539 = vmatprep.subr.bf16.mxu0 0
    %540 = vmatpush1.bf16.msra.mxu0 0
    %541 = vmatprep.subr.bf16.mxu0 %v518
    %542 = vmatpush1.bf16.msra.mxu0 %v517
    %543 = vmatprep.subr.bf16.mxu0 %v516
    %544 = vmatpush1.bf16.msra.mxu0 %v515
    %545 = vmatprep.subr.bf16.mxu0 %v514
    %546 = vmatpush1.bf16.msra.mxu0 %v513
    %547 = vmatprep.subr.bf16.mxu0 %v512
    %548 = vmatpush1.bf16.msra.mxu0 %v511
    %549 = vmatprep.subr.bf16.mxu0 0
    %550 = vmatpush2.bf16.msra.mxu0 0
    %551 = vmatprep.subr.bf16.mxu0 0
    %552 = vmatpush2.bf16.msra.mxu0 0
    %553 = vmatprep.subr.bf16.mxu0 0
    %554 = vmatpush2.bf16.msra.mxu0 0
    %555 = vmatprep.subr.bf16.mxu0 0
    %556 = vmatpush2.bf16.msra.mxu0 0
    %557 = vmatprep.subr.bf16.mxu0 0
    %558 = vmatpush2.bf16.msra.mxu0 0
    %559 = vmatprep.subr.bf16.mxu0 0
    %560 = vmatpush2.bf16.msra.mxu0 0
    %561 = vmatprep.subr.bf16.mxu0 0
    %562 = vmatpush2.bf16.msra.mxu0 0
    %563 = vmatprep.subr.bf16.mxu0 0
    %564 = vmatpush2.bf16.msra.mxu0 0
    %565 = vmatprep.mubr.bf16.mxu0 0
    %566 = vmatmul.mubr.bf16.gmra.mxu0 %v528
    %v567 = vpop.f32.mrf.mxu0
    %v568 = vadd.f32 %v480, %v567
    %v569 = vpop.f32.mrf.mxu0
    %v570 = vadd.f32 %v484, %v569
    %v571 = vpop.f32.mrf.mxu0
    %v572 = vadd.f32 %v480, %v571
    %v573 = vpop.f32.mrf.mxu0
    %v574 = vadd.f32 %v484, %v573
    %575 = vmatprep.mubr.bf16.mxu0 0
    %576 = vmatmul.mubr.bf16.gmra.mxu0 %v531
    %v577 = vpop.f32.mrf.mxu0
    %v578 = vadd.f32 %v480, %v577
    %v579 = vpop.f32.mrf.mxu0
    %v580 = vadd.f32 %v484, %v579
    %v581 = vpop.f32.mrf.mxu0
    %v582 = vadd.f32 %v480, %v581
    %v583 = vpop.f32.mrf.mxu0
    %v584 = vadd.f32 %v484, %v583
    %585 = vdwg.mxu0
    %v586 = vpack.c.bf16 %v572, %v568
    %v587 = vpack.c.bf16 %v582, %v578
    %v588 = vpack.c.bf16 %v574, %v570
    %v589 = vpack.c.bf16 %v584, %v580
    %591 = vrot.lane.b32.xlu0 %v586, 64
    %v592 = vpop.permute.xlu0 %591
    %vm593 = vcmask 130048
    %v595 = vsel %vm593, %v586, 0
    %v598 = vsel %vm593, %v592, 0
    %600 = vmatprep.subr.bf16.mxu0 0
    %601 = vmatpush1.bf16.xpose.msra.mxu0 0
    %602 = vmatprep.subr.bf16.mxu0 0
    %603 = vmatpush1.bf16.xpose.msra.mxu0 0
    %604 = vmatprep.subr.bf16.mxu0 0
    %605 = vmatpush1.bf16.xpose.msra.mxu0 0
    %606 = vmatprep.subr.bf16.mxu0 0
    %607 = vmatpush1.bf16.xpose.msra.mxu0 0
    %608 = vmatprep.subr.bf16.mxu0 0
    %609 = vmatpush1.bf16.xpose.msra.mxu0 0
    %610 = vmatprep.subr.bf16.mxu0 0
    %611 = vmatpush1.bf16.xpose.msra.mxu0 0
    %612 = vmatprep.subr.bf16.mxu0 0
    %613 = vmatpush1.bf16.xpose.msra.mxu0 0
    %614 = vmatprep.subr.bf16.mxu0 0
    %615 = vmatpush1.bf16.xpose.msra.mxu0 %v598
    %616 = vmatprep.subr.bf16.mxu0 0
    %617 = vmatpush2.bf16.xpose.msra.mxu0 0
    %618 = vmatprep.subr.bf16.mxu0 0
    %619 = vmatpush2.bf16.xpose.msra.mxu0 0
    %620 = vmatprep.subr.bf16.mxu0 0
    %621 = vmatpush2.bf16.xpose.msra.mxu0 0
    %622 = vmatprep.subr.bf16.mxu0 0
    %623 = vmatpush2.bf16.xpose.msra.mxu0 0
    %624 = vmatprep.subr.bf16.mxu0 0
    %625 = vmatpush2.bf16.xpose.msra.mxu0 0
    %626 = vmatprep.subr.bf16.mxu0 0
    %627 = vmatpush2.bf16.xpose.msra.mxu0 0
    %628 = vmatprep.subr.bf16.mxu0 0
    %629 = vmatpush2.bf16.xpose.msra.mxu0 0
    %630 = vmatprep.subr.bf16.mxu0 0
    %631 = vmatpush2.bf16.xpose.msra.mxu0 0
    %632 = vmatprep.mubr.bf16.mxu0 0
    %633 = vmatmul.mubr.bf16.gmra.mxu0 %v595
    %v634 = vpop.f32.mrf.mxu0
    %v635 = vadd.f32 0.0, %v634
    %v636 = vpop.f32.mrf.mxu0
    %v637 = vpop.f32.mrf.mxu0
    %v638 = vadd.f32 0.0, %v637
    %v639 = vpop.f32.mrf.mxu0
    %640 = vdwg.mxu0
    %642 = vrot.lane.b32.xlu0 %v587, 64
    %v643 = vpop.permute.xlu0 %642
    %v645 = vsel %vm593, %v587, 0
    %v648 = vsel %vm593, %v643, 0
    %650 = vmatprep.subr.bf16.mxu0 0
    %651 = vmatpush1.bf16.xpose.msra.mxu0 0
    %652 = vmatprep.subr.bf16.mxu0 0
    %653 = vmatpush1.bf16.xpose.msra.mxu0 0
    %654 = vmatprep.subr.bf16.mxu0 0
    %655 = vmatpush1.bf16.xpose.msra.mxu0 0
    %656 = vmatprep.subr.bf16.mxu0 0
    %657 = vmatpush1.bf16.xpose.msra.mxu0 0
    %658 = vmatprep.subr.bf16.mxu0 0
    %659 = vmatpush1.bf16.xpose.msra.mxu0 0
    %660 = vmatprep.subr.bf16.mxu0 0
    %661 = vmatpush1.bf16.xpose.msra.mxu0 0
    %662 = vmatprep.subr.bf16.mxu0 0
    %663 = vmatpush1.bf16.xpose.msra.mxu0 0
    %664 = vmatprep.subr.bf16.mxu0 0
    %665 = vmatpush1.bf16.xpose.msra.mxu0 %v648
    %666 = vmatprep.subr.bf16.mxu0 0
    %667 = vmatpush2.bf16.xpose.msra.mxu0 0
    %668 = vmatprep.subr.bf16.mxu0 0
    %669 = vmatpush2.bf16.xpose.msra.mxu0 0
    %670 = vmatprep.subr.bf16.mxu0 0
    %671 = vmatpush2.bf16.xpose.msra.mxu0 0
    %672 = vmatprep.subr.bf16.mxu0 0
    %673 = vmatpush2.bf16.xpose.msra.mxu0 0
    %674 = vmatprep.subr.bf16.mxu0 0
    %675 = vmatpush2.bf16.xpose.msra.mxu0 0
    %676 = vmatprep.subr.bf16.mxu0 0
    %677 = vmatpush2.bf16.xpose.msra.mxu0 0
    %678 = vmatprep.subr.bf16.mxu0 0
    %679 = vmatpush2.bf16.xpose.msra.mxu0 0
    %680 = vmatprep.subr.bf16.mxu0 0
    %681 = vmatpush2.bf16.xpose.msra.mxu0 0
    %682 = vmatprep.mubr.bf16.mxu0 0
    %683 = vmatmul.mubr.bf16.gmra.mxu0 %v645
    %v684 = vpop.f32.mrf.mxu0
    %v685 = vadd.f32 0.0, %v684
    %v686 = vpop.f32.mrf.mxu0
    %v687 = vpop.f32.mrf.mxu0
    %v688 = vadd.f32 0.0, %v687
    %v689 = vpop.f32.mrf.mxu0
    %690 = vdwg.mxu0
    %v691 = vsel %vm593, %v635, -inf
    %692 = vmax.xlane.f32.xlu0 %v691
    %v693 = vpop.xlane.xlu0 %692
    %v694 = vsel %vm593, %v638, -inf
    %695 = vmax.xlane.f32.xlu0 %v694
    %v696 = vpop.xlane.xlu0 %695
    %v697 = vsel %vm593, %v685, -inf
    %698 = vmax.xlane.f32.xlu0 %v697
    %v699 = vpop.xlane.xlu0 %698
    %v700 = vsel %vm593, %v688, -inf
    %701 = vmax.xlane.f32.xlu0 %v700
    %v702 = vpop.xlane.xlu0 %701
    %v703 = vsub.f32 %v635, %v693
    %v704 = vsub.f32 %v638, %v696
    %v705 = vsub.f32 %v685, %v699
    %v706 = vsub.f32 %v688, %v702
    %v707 = vmul.f32 %v703, 1.442695
    %v708 = vpow.pop %v707
    %v709 = vmul.f32 %v704, 1.442695
    %v710 = vpow.pop %v709
    %v711 = vmul.f32 %v705, 1.442695
    %v712 = vpow.pop %v711
    %v713 = vmul.f32 %v706, 1.442695
    %v714 = vpow.pop %v713
    %v715 = vsel %vm593, %v708, 0.0
    %716 = vadd.xlane.f32.xlu0 %v715
    %v717 = vpop.xlane.xlu0 %716
    %v718 = vsel %vm593, %v710, 0.0
    %719 = vadd.xlane.f32.xlu0 %v718
    %v720 = vpop.xlane.xlu0 %719
    %v721 = vsel %vm593, %v712, 0.0
    %722 = vadd.xlane.f32.xlu0 %v721
    %v723 = vpop.xlane.xlu0 %722
    %v724 = vsel %vm593, %v714, 0.0
    %725 = vadd.xlane.f32.xlu0 %v724
    %v726 = vpop.xlane.xlu0 %725
    %v727 = vpack.c.bf16 %v710, %v708
    %v728 = vpack.c.bf16 %v714, %v712
    %v730 = vsel %vm593, %v727, 0
    %732 = vmatprep.subr.bf16.mxu0 0
    %733 = vmatpush1.bf16.msra.mxu0 0
    %734 = vmatprep.subr.bf16.mxu0 0
    %735 = vmatpush1.bf16.msra.mxu0 0
    %736 = vmatprep.subr.bf16.mxu0 0
    %737 = vmatpush1.bf16.msra.mxu0 0
    %738 = vmatprep.subr.bf16.mxu0 0
    %739 = vmatpush1.bf16.msra.mxu0 0
    %740 = vmatprep.subr.bf16.mxu0 0
    %741 = vmatpush1.bf16.msra.mxu0 0
    %742 = vmatprep.subr.bf16.mxu0 0
    %743 = vmatpush1.bf16.msra.mxu0 0
    %744 = vmatprep.subr.bf16.mxu0 0
    %745 = vmatpush1.bf16.msra.mxu0 0
    %746 = vmatprep.subr.bf16.mxu0 0
    %747 = vmatpush1.bf16.msra.mxu0 %v588
    %748 = vmatprep.subr.bf16.mxu0 0
    %749 = vmatpush2.bf16.msra.mxu0 0
    %750 = vmatprep.subr.bf16.mxu0 0
    %751 = vmatpush2.bf16.msra.mxu0 0
    %752 = vmatprep.subr.bf16.mxu0 0
    %753 = vmatpush2.bf16.msra.mxu0 0
    %754 = vmatprep.subr.bf16.mxu0 0
    %755 = vmatpush2.bf16.msra.mxu0 0
    %756 = vmatprep.subr.bf16.mxu0 0
    %757 = vmatpush2.bf16.msra.mxu0 0
    %758 = vmatprep.subr.bf16.mxu0 0
    %759 = vmatpush2.bf16.msra.mxu0 0
    %760 = vmatprep.subr.bf16.mxu0 0
    %761 = vmatpush2.bf16.msra.mxu0 0
    %762 = vmatprep.subr.bf16.mxu0 0
    %763 = vmatpush2.bf16.msra.mxu0 0
    %764 = vmatprep.mubr.bf16.mxu0 0
    %765 = vmatmul.mubr.bf16.gmra.mxu0 %v730
    %v766 = vpop.f32.mrf.mxu0
    %v767 = vadd.f32 0.0, %v766
    %v768 = vpop.f32.mrf.mxu0
    %v769 = vpop.f32.mrf.mxu0
    %v770 = vadd.f32 0.0, %v769
    %v771 = vpop.f32.mrf.mxu0
    %772 = vdwg.mxu0
    %v774 = vsel %vm593, %v728, 0
    %776 = vmatprep.subr.bf16.mxu0 0
    %777 = vmatpush1.bf16.msra.mxu0 0
    %778 = vmatprep.subr.bf16.mxu0 0
    %779 = vmatpush1.bf16.msra.mxu0 0
    %780 = vmatprep.subr.bf16.mxu0 0
    %781 = vmatpush1.bf16.msra.mxu0 0
    %782 = vmatprep.subr.bf16.mxu0 0
    %783 = vmatpush1.bf16.msra.mxu0 0
    %784 = vmatprep.subr.bf16.mxu0 0
    %785 = vmatpush1.bf16.msra.mxu0 0
    %786 = vmatprep.subr.bf16.mxu0 0
    %787 = vmatpush1.bf16.msra.mxu0 0
    %788 = vmatprep.subr.bf16.mxu0 0
    %789 = vmatpush1.bf16.msra.mxu0 0
    %790 = vmatprep.subr.bf16.mxu0 0
    %791 = vmatpush1.bf16.msra.mxu0 %v589
    %792 = vmatprep.subr.bf16.mxu0 0
    %793 = vmatpush2.bf16.msra.mxu0 0
    %794 = vmatprep.subr.bf16.mxu0 0
    %795 = vmatpush2.bf16.msra.mxu0 0
    %796 = vmatprep.subr.bf16.mxu0 0
    %797 = vmatpush2.bf16.msra.mxu0 0
    %798 = vmatprep.subr.bf16.mxu0 0
    %799 = vmatpush2.bf16.msra.mxu0 0
    %800 = vmatprep.subr.bf16.mxu0 0
    %801 = vmatpush2.bf16.msra.mxu0 0
    %802 = vmatprep.subr.bf16.mxu0 0
    %803 = vmatpush2.bf16.msra.mxu0 0
    %804 = vmatprep.subr.bf16.mxu0 0
    %805 = vmatpush2.bf16.msra.mxu0 0
    %806 = vmatprep.subr.bf16.mxu0 0
    %807 = vmatpush2.bf16.msra.mxu0 0
    %808 = vmatprep.mubr.bf16.mxu0 0
    %809 = vmatmul.mubr.bf16.gmra.mxu0 %v774
    %v810 = vpop.f32.mrf.mxu0
    %v811 = vadd.f32 0.0, %v810
    %v812 = vpop.f32.mrf.mxu0
    %v813 = vpop.f32.mrf.mxu0
    %v814 = vadd.f32 0.0, %v813
    %v815 = vpop.f32.mrf.mxu0
    %816 = vdwg.mxu0
    %v817 = vrcp.pop %v717
    %v818 = vrcp.pop %v720
    %v819 = vrcp.pop %v723
    %v820 = vrcp.pop %v726
    %v821 = vmul.f32 %v767, %v817
    %v822 = vmul.f32 %v770, %v818
    %v823 = vmul.f32 %v811, %v819
    %v824 = vmul.f32 %v814, %v820
    %v825 = vpack.c.bf16 %v822, %v821
    %v826 = vpack.c.bf16 %v824, %v823
    %v827 = vld [vmem:[%s4] sm:$0xf]
    %v828 = vld [vmem:[%s4 + $0x4] sm:$0xf]
    %829 = vrot.lane.b32.xlu0 %v586, 112
    %v830 = vpop.permute.xlu0 %829
    %831 = vrot.lane.b32.xlu0 %v586, 48
    %v832 = vpop.permute.xlu0 %831
    %v834 = vsel %vm593, %v830, 0
    %v837 = vsel %vm593, %v832, 0
    %839 = vmatprep.subr.bf16.mxu0 0
    %840 = vmatpush1.bf16.xpose.msra.mxu0 0
    %841 = vmatprep.subr.bf16.mxu0 0
    %842 = vmatpush1.bf16.xpose.msra.mxu0 0
    %843 = vmatprep.subr.bf16.mxu0 0
    %844 = vmatpush1.bf16.xpose.msra.mxu0 0
    %845 = vmatprep.subr.bf16.mxu0 0
    %846 = vmatpush1.bf16.xpose.msra.mxu0 0
    %847 = vmatprep.subr.bf16.mxu0 0
    %848 = vmatpush1.bf16.xpose.msra.mxu0 0
    %849 = vmatprep.subr.bf16.mxu0 0
    %850 = vmatpush1.bf16.xpose.msra.mxu0 0
    %851 = vmatprep.subr.bf16.mxu0 0
    %852 = vmatpush1.bf16.xpose.msra.mxu0 0
    %853 = vmatprep.subr.bf16.mxu0 0
    %854 = vmatpush1.bf16.xpose.msra.mxu0 %v837
    %855 = vmatprep.subr.bf16.mxu0 0
    %856 = vmatpush2.bf16.xpose.msra.mxu0 0
    %857 = vmatprep.subr.bf16.mxu0 0
    %858 = vmatpush2.bf16.xpose.msra.mxu0 0
    %859 = vmatprep.subr.bf16.mxu0 0
    %860 = vmatpush2.bf16.xpose.msra.mxu0 0
    %861 = vmatprep.subr.bf16.mxu0 0
    %862 = vmatpush2.bf16.xpose.msra.mxu0 0
    %863 = vmatprep.subr.bf16.mxu0 0
    %864 = vmatpush2.bf16.xpose.msra.mxu0 0
    %865 = vmatprep.subr.bf16.mxu0 0
    %866 = vmatpush2.bf16.xpose.msra.mxu0 0
    %867 = vmatprep.subr.bf16.mxu0 0
    %868 = vmatpush2.bf16.xpose.msra.mxu0 0
    %869 = vmatprep.subr.bf16.mxu0 0
    %870 = vmatpush2.bf16.xpose.msra.mxu0 0
    %871 = vmatprep.mubr.bf16.mxu0 0
    %872 = vmatmul.mubr.bf16.gmra.mxu0 %v834
    %v873 = vpop.f32.mrf.mxu0
    %v874 = vadd.f32 0.0, %v873
    %v875 = vpop.f32.mrf.mxu0
    %v876 = vpop.f32.mrf.mxu0
    %v877 = vadd.f32 0.0, %v876
    %v878 = vpop.f32.mrf.mxu0
    %879 = vdwg.mxu0
    %880 = vrot.lane.b32.xlu0 %v587, 112
    %v881 = vpop.permute.xlu0 %880
    %882 = vrot.lane.b32.xlu0 %v587, 48
    %v883 = vpop.permute.xlu0 %882
    %v885 = vsel %vm593, %v881, 0
    %v888 = vsel %vm593, %v883, 0
    %890 = vmatprep.subr.bf16.mxu0 0
    %891 = vmatpush1.bf16.xpose.msra.mxu0 0
    %892 = vmatprep.subr.bf16.mxu0 0
    %893 = vmatpush1.bf16.xpose.msra.mxu0 0
    %894 = vmatprep.subr.bf16.mxu0 0
    %895 = vmatpush1.bf16.xpose.msra.mxu0 0
    %896 = vmatprep.subr.bf16.mxu0 0
    %897 = vmatpush1.bf16.xpose.msra.mxu0 0
    %898 = vmatprep.subr.bf16.mxu0 0
    %899 = vmatpush1.bf16.xpose.msra.mxu0 0
    %900 = vmatprep.subr.bf16.mxu0 0
    %901 = vmatpush1.bf16.xpose.msra.mxu0 0
    %902 = vmatprep.subr.bf16.mxu0 0
    %903 = vmatpush1.bf16.xpose.msra.mxu0 0
    %904 = vmatprep.subr.bf16.mxu0 0
    %905 = vmatpush1.bf16.xpose.msra.mxu0 %v888
    %906 = vmatprep.subr.bf16.mxu0 0
    %907 = vmatpush2.bf16.xpose.msra.mxu0 0
    %908 = vmatprep.subr.bf16.mxu0 0
    %909 = vmatpush2.bf16.xpose.msra.mxu0 0
    %910 = vmatprep.subr.bf16.mxu0 0
    %911 = vmatpush2.bf16.xpose.msra.mxu0 0
    %912 = vmatprep.subr.bf16.mxu0 0
    %913 = vmatpush2.bf16.xpose.msra.mxu0 0
    %914 = vmatprep.subr.bf16.mxu0 0
    %915 = vmatpush2.bf16.xpose.msra.mxu0 0
    %916 = vmatprep.subr.bf16.mxu0 0
    %917 = vmatpush2.bf16.xpose.msra.mxu0 0
    %918 = vmatprep.subr.bf16.mxu0 0
    %919 = vmatpush2.bf16.xpose.msra.mxu0 0
    %920 = vmatprep.subr.bf16.mxu0 0
    %921 = vmatpush2.bf16.xpose.msra.mxu0 0
    %922 = vmatprep.mubr.bf16.mxu0 0
    %923 = vmatmul.mubr.bf16.gmra.mxu0 %v885
    %v924 = vpop.f32.mrf.mxu0
    %v925 = vadd.f32 0.0, %v924
    %v926 = vpop.f32.mrf.mxu0
    %v927 = vpop.f32.mrf.mxu0
    %v928 = vadd.f32 0.0, %v927
    %v929 = vpop.f32.mrf.mxu0
    %930 = vdwg.mxu0
    %v931 = vsel %vm593, %v874, -inf
    %932 = vmax.xlane.f32.xlu0 %v931
    %v933 = vpop.xlane.xlu0 %932
    %v934 = vsel %vm593, %v877, -inf
    %935 = vmax.xlane.f32.xlu0 %v934
    %v936 = vpop.xlane.xlu0 %935
    %v937 = vsel %vm593, %v925, -inf
    %938 = vmax.xlane.f32.xlu0 %v937
    %v939 = vpop.xlane.xlu0 %938
    %v940 = vsel %vm593, %v928, -inf
    %941 = vmax.xlane.f32.xlu0 %v940
    %v942 = vpop.xlane.xlu0 %941
    %v943 = vsub.f32 %v874, %v933
    %v944 = vsub.f32 %v877, %v936
    %v945 = vsub.f32 %v925, %v939
    %v946 = vsub.f32 %v928, %v942
    %v947 = vmul.f32 %v943, 1.442695
    %v948 = vpow.pop %v947
    %v949 = vmul.f32 %v944, 1.442695
    %v950 = vpow.pop %v949
    %v951 = vmul.f32 %v945, 1.442695
    %v952 = vpow.pop %v951
    %v953 = vmul.f32 %v946, 1.442695
    %v954 = vpow.pop %v953
    %v955 = vsel %vm593, %v948, 0.0
    %956 = vadd.xlane.f32.xlu0 %v955
    %v957 = vpop.xlane.xlu0 %956
    %v958 = vsel %vm593, %v950, 0.0
    %959 = vadd.xlane.f32.xlu0 %v958
    %v960 = vpop.xlane.xlu0 %959
    %v961 = vsel %vm593, %v952, 0.0
    %962 = vadd.xlane.f32.xlu0 %v961
    %v963 = vpop.xlane.xlu0 %962
    %v964 = vsel %vm593, %v954, 0.0
    %965 = vadd.xlane.f32.xlu0 %v964
    %v966 = vpop.xlane.xlu0 %965
    %v967 = vpack.c.bf16 %v950, %v948
    %v968 = vpack.c.bf16 %v954, %v952
    %970 = vrot.lane.b32.xlu0 %v588, 112
    %v971 = vpop.permute.xlu0 %970
    %v974 = vsel %vm593, %v967, 0
    %976 = vmatprep.subr.bf16.mxu0 0
    %977 = vmatpush1.bf16.msra.mxu0 0
    %978 = vmatprep.subr.bf16.mxu0 0
    %979 = vmatpush1.bf16.msra.mxu0 0
    %980 = vmatprep.subr.bf16.mxu0 0
    %981 = vmatpush1.bf16.msra.mxu0 0
    %982 = vmatprep.subr.bf16.mxu0 0
    %983 = vmatpush1.bf16.msra.mxu0 0
    %984 = vmatprep.subr.bf16.mxu0 0
    %985 = vmatpush1.bf16.msra.mxu0 0
    %986 = vmatprep.subr.bf16.mxu0 0
    %987 = vmatpush1.bf16.msra.mxu0 0
    %988 = vmatprep.subr.bf16.mxu0 0
    %989 = vmatpush1.bf16.msra.mxu0 0
    %990 = vmatprep.subr.bf16.mxu0 0
    %991 = vmatpush1.bf16.msra.mxu0 %v971
    %992 = vmatprep.subr.bf16.mxu0 0
    %993 = vmatpush2.bf16.msra.mxu0 0
    %994 = vmatprep.subr.bf16.mxu0 0
    %995 = vmatpush2.bf16.msra.mxu0 0
    %996 = vmatprep.subr.bf16.mxu0 0
    %997 = vmatpush2.bf16.msra.mxu0 0
    %998 = vmatprep.subr.bf16.mxu0 0
    %999 = vmatpush2.bf16.msra.mxu0 0
    %1000 = vmatprep.subr.bf16.mxu0 0
    %1001 = vmatpush2.bf16.msra.mxu0 0
    %1002 = vmatprep.subr.bf16.mxu0 0
    %1003 = vmatpush2.bf16.msra.mxu0 0
    %1004 = vmatprep.subr.bf16.mxu0 0
    %1005 = vmatpush2.bf16.msra.mxu0 0
    %1006 = vmatprep.subr.bf16.mxu0 0
    %1007 = vmatpush2.bf16.msra.mxu0 0
    %1008 = vmatprep.mubr.bf16.mxu0 0
    %1009 = vmatmul.mubr.bf16.gmra.mxu0 %v974
    %v1010 = vpop.f32.mrf.mxu0
    %v1011 = vadd.f32 0.0, %v1010
    %v1012 = vpop.f32.mrf.mxu0
    %v1013 = vpop.f32.mrf.mxu0
    %v1014 = vadd.f32 0.0, %v1013
    %v1015 = vpop.f32.mrf.mxu0
    %1016 = vdwg.mxu0
    %1018 = vrot.lane.b32.xlu0 %v589, 112
    %v1019 = vpop.permute.xlu0 %1018
    %v1022 = vsel %vm593, %v968, 0
    %1024 = vmatprep.subr.bf16.mxu0 0
    %1025 = vmatpush1.bf16.msra.mxu0 0
    %1026 = vmatprep.subr.bf16.mxu0 0
    %1027 = vmatpush1.bf16.msra.mxu0 0
    %1028 = vmatprep.subr.bf16.mxu0 0
    %1029 = vmatpush1.bf16.msra.mxu0 0
    %1030 = vmatprep.subr.bf16.mxu0 0
    %1031 = vmatpush1.bf16.msra.mxu0 0
    %1032 = vmatprep.subr.bf16.mxu0 0
    %1033 = vmatpush1.bf16.msra.mxu0 0
    %1034 = vmatprep.subr.bf16.mxu0 0
    %1035 = vmatpush1.bf16.msra.mxu0 0
    %1036 = vmatprep.subr.bf16.mxu0 0
    %1037 = vmatpush1.bf16.msra.mxu0 0
    %1038 = vmatprep.subr.bf16.mxu0 0
    %1039 = vmatpush1.bf16.msra.mxu0 %v1019
    %1040 = vmatprep.subr.bf16.mxu0 0
    %1041 = vmatpush2.bf16.msra.mxu0 0
    %1042 = vmatprep.subr.bf16.mxu0 0
    %1043 = vmatpush2.bf16.msra.mxu0 0
    %1044 = vmatprep.subr.bf16.mxu0 0
    %1045 = vmatpush2.bf16.msra.mxu0 0
    %1046 = vmatprep.subr.bf16.mxu0 0
    %1047 = vmatpush2.bf16.msra.mxu0 0
    %1048 = vmatprep.subr.bf16.mxu0 0
    %1049 = vmatpush2.bf16.msra.mxu0 0
    %1050 = vmatprep.subr.bf16.mxu0 0
    %1051 = vmatpush2.bf16.msra.mxu0 0
    %1052 = vmatprep.subr.bf16.mxu0 0
    %1053 = vmatpush2.bf16.msra.mxu0 0
    %1054 = vmatprep.subr.bf16.mxu0 0
    %1055 = vmatpush2.bf16.msra.mxu0 0
    %1056 = vmatprep.mubr.bf16.mxu0 0
    %1057 = vmatmul.mubr.bf16.gmra.mxu0 %v1022
    %v1058 = vpop.f32.mrf.mxu0
    %v1059 = vadd.f32 0.0, %v1058
    %v1060 = vpop.f32.mrf.mxu0
    %v1061 = vpop.f32.mrf.mxu0
    %v1062 = vadd.f32 0.0, %v1061
    %v1063 = vpop.f32.mrf.mxu0
    %1064 = vdwg.mxu0
    %v1065 = vrcp.pop %v957
    %v1066 = vrcp.pop %v960
    %v1067 = vrcp.pop %v963
    %v1068 = vrcp.pop %v966
    %v1069 = vmul.f32 %v1011, %v1065
    %v1070 = vmul.f32 %v1014, %v1066
    %v1071 = vmul.f32 %v1059, %v1067
    %v1072 = vmul.f32 %v1062, %v1068
    %v1073 = vpack.c.bf16 %v1070, %v1069
    %v1074 = vpack.c.bf16 %v1072, %v1071
    %v1075 = vld [vmem:[%s4 + $0x8] sm:$0xf]
    %v1076 = vld [vmem:[%s4 + $0xc] sm:$0xf]
    %v1079 = vunpack.c.l.b16 %v1075
    %v1080 = vunpack.c.l.b16 %v1076
    %v1081 = vpack.c.b16 %v1080, %v1079
    %v1084 = vsel %vm593, %v1073, 0
    %v1087 = vsel %vm593, %v1074, 0
    %1089 = vmatprep.subr.bf16.mxu0 0
    %1090 = vmatpush1.bf16.msra.mxu0 0
    %1091 = vmatprep.subr.bf16.mxu0 0
    %1092 = vmatpush1.bf16.msra.mxu0 0
    %1093 = vmatprep.subr.bf16.mxu0 0
    %1094 = vmatpush1.bf16.msra.mxu0 0
    %1095 = vmatprep.subr.bf16.mxu0 0
    %1096 = vmatpush1.bf16.msra.mxu0 0
    %1097 = vmatprep.subr.bf16.mxu0 0
    %1098 = vmatpush1.bf16.msra.mxu0 0
    %1099 = vmatprep.subr.bf16.mxu0 0
    %1100 = vmatpush1.bf16.msra.mxu0 0
    %1101 = vmatprep.subr.bf16.mxu0 0
    %1102 = vmatpush1.bf16.msra.mxu0 0
    %1103 = vmatprep.subr.bf16.mxu0 0
    %1104 = vmatpush1.bf16.msra.mxu0 %v1081
    %1105 = vmatprep.subr.bf16.mxu0 0
    %1106 = vmatpush2.bf16.msra.mxu0 0
    %1107 = vmatprep.subr.bf16.mxu0 0
    %1108 = vmatpush2.bf16.msra.mxu0 0
    %1109 = vmatprep.subr.bf16.mxu0 0
    %1110 = vmatpush2.bf16.msra.mxu0 0
    %1111 = vmatprep.subr.bf16.mxu0 0
    %1112 = vmatpush2.bf16.msra.mxu0 0
    %1113 = vmatprep.subr.bf16.mxu0 0
    %1114 = vmatpush2.bf16.msra.mxu0 0
    %1115 = vmatprep.subr.bf16.mxu0 0
    %1116 = vmatpush2.bf16.msra.mxu0 0
    %1117 = vmatprep.subr.bf16.mxu0 0
    %1118 = vmatpush2.bf16.msra.mxu0 0
    %1119 = vmatprep.subr.bf16.mxu0 0
    %1120 = vmatpush2.bf16.msra.mxu0 0
    %1121 = vmatprep.mubr.bf16.mxu0 0
    %1122 = vmatmul.mubr.bf16.gmra.mxu0 %v1084
    %v1123 = vpop.f32.mrf.mxu0
    %v1124 = vadd.f32 0.0, %v1123
    %v1125 = vpop.f32.mrf.mxu0
    %v1126 = vpop.f32.mrf.mxu0
    %v1127 = vadd.f32 0.0, %v1126
    %v1128 = vpop.f32.mrf.mxu0
    %1129 = vmatprep.mubr.bf16.mxu0 0
    %1130 = vmatmul.mubr.bf16.gmra.mxu0 %v1087
    %v1131 = vpop.f32.mrf.mxu0
    %v1132 = vadd.f32 0.0, %v1131
    %v1133 = vpop.f32.mrf.mxu0
    %v1134 = vpop.f32.mrf.mxu0
    %v1135 = vadd.f32 0.0, %v1134
    %v1136 = vpop.f32.mrf.mxu0
    %1137 = vdwg.mxu0
    %v1140 = vunpack.c.l.b16 %v827
    %v1141 = vunpack.c.l.b16 %v828
    %v1142 = vpack.c.b16 %v1141, %v1140
    %v1145 = vsel %vm593, %v825, 0
    %v1148 = vsel %vm593, %v826, 0
    %1150 = vmatprep.subr.bf16.mxu0 0
    %1151 = vmatpush1.bf16.msra.mxu0 0
    %1152 = vmatprep.subr.bf16.mxu0 0
    %1153 = vmatpush1.bf16.msra.mxu0 0
    %1154 = vmatprep.subr.bf16.mxu0 0
    %1155 = vmatpush1.bf16.msra.mxu0 0
    %1156 = vmatprep.subr.bf16.mxu0 0
    %1157 = vmatpush1.bf16.msra.mxu0 0
    %1158 = vmatprep.subr.bf16.mxu0 0
    %1159 = vmatpush1.bf16.msra.mxu0 0
    %1160 = vmatprep.subr.bf16.mxu0 0
    %1161 = vmatpush1.bf16.msra.mxu0 0
    %1162 = vmatprep.subr.bf16.mxu0 0
    %1163 = vmatpush1.bf16.msra.mxu0 0
    %1164 = vmatprep.subr.bf16.mxu0 0
    %1165 = vmatpush1.bf16.msra.mxu0 %v1142
    %1166 = vmatprep.subr.bf16.mxu0 0
    %1167 = vmatpush2.bf16.msra.mxu0 0
    %1168 = vmatprep.subr.bf16.mxu0 0
    %1169 = vmatpush2.bf16.msra.mxu0 0
    %1170 = vmatprep.subr.bf16.mxu0 0
    %1171 = vmatpush2.bf16.msra.mxu0 0
    %1172 = vmatprep.subr.bf16.mxu0 0
    %1173 = vmatpush2.bf16.msra.mxu0 0
    %1174 = vmatprep.subr.bf16.mxu0 0
    %1175 = vmatpush2.bf16.msra.mxu0 0
    %1176 = vmatprep.subr.bf16.mxu0 0
    %1177 = vmatpush2.bf16.msra.mxu0 0
    %1178 = vmatprep.subr.bf16.mxu0 0
    %1179 = vmatpush2.bf16.msra.mxu0 0
    %1180 = vmatprep.subr.bf16.mxu0 0
    %1181 = vmatpush2.bf16.msra.mxu0 0
    %1182 = vmatprep.mubr.bf16.mxu0 0
    %1183 = vmatmul.mubr.bf16.gmra.mxu0 %v1145
    %v1184 = vpop.f32.mrf.mxu0
    %v1185 = vadd.f32 %v1124, %v1184
    %v1186 = vpop.f32.mrf.mxu0
    %v1187 = vpop.f32.mrf.mxu0
    %v1188 = vadd.f32 %v1127, %v1187
    %v1189 = vpop.f32.mrf.mxu0
    %1190 = vmatprep.mubr.bf16.mxu0 0
    %1191 = vmatmul.mubr.bf16.gmra.mxu0 %v1148
    %v1192 = vpop.f32.mrf.mxu0
    %v1193 = vadd.f32 %v1132, %v1192
    %v1194 = vpop.f32.mrf.mxu0
    %v1195 = vpop.f32.mrf.mxu0
    %v1196 = vadd.f32 %v1135, %v1195
    %v1197 = vpop.f32.mrf.mxu0
    %1198 = vdwg.mxu0
    %1199 = vrot.lane.b32.xlu0 %v586, 96
    %v1200 = vpop.permute.xlu0 %1199
    %1201 = vrot.lane.b32.xlu0 %v586, 32
    %v1202 = vpop.permute.xlu0 %1201
    %v1204 = vsel %vm593, %v1200, 0
    %v1207 = vsel %vm593, %v1202, 0
    %1209 = vmatprep.subr.bf16.mxu0 0
    %1210 = vmatpush1.bf16.xpose.msra.mxu0 0
    %1211 = vmatprep.subr.bf16.mxu0 0
    %1212 = vmatpush1.bf16.xpose.msra.mxu0 0
    %1213 = vmatprep.subr.bf16.mxu0 0
    %1214 = vmatpush1.bf16.xpose.msra.mxu0 0
    %1215 = vmatprep.subr.bf16.mxu0 0
    %1216 = vmatpush1.bf16.xpose.msra.mxu0 0
    %1217 = vmatprep.subr.bf16.mxu0 0
    %1218 = vmatpush1.bf16.xpose.msra.mxu0 0
    %1219 = vmatprep.subr.bf16.mxu0 0
    %1220 = vmatpush1.bf16.xpose.msra.mxu0 0
    %1221 = vmatprep.subr.bf16.mxu0 0
    %1222 = vmatpush1.bf16.xpose.msra.mxu0 0
    %1223 = vmatprep.subr.bf16.mxu0 0
    %1224 = vmatpush1.bf16.xpose.msra.mxu0 %v1207
    %1225 = vmatprep.subr.bf16.mxu0 0
    %1226 = vmatpush2.bf16.xpose.msra.mxu0 0
    %1227 = vmatprep.subr.bf16.mxu0 0
    %1228 = vmatpush2.bf16.xpose.msra.mxu0 0
    %1229 = vmatprep.subr.bf16.mxu0 0
    %1230 = vmatpush2.bf16.xpose.msra.mxu0 0
    %1231 = vmatprep.subr.bf16.mxu0 0
    %1232 = vmatpush2.bf16.xpose.msra.mxu0 0
    %1233 = vmatprep.subr.bf16.mxu0 0
    %1234 = vmatpush2.bf16.xpose.msra.mxu0 0
    %1235 = vmatprep.subr.bf16.mxu0 0
    %1236 = vmatpush2.bf16.xpose.msra.mxu0 0
    %1237 = vmatprep.subr.bf16.mxu0 0
    %1238 = vmatpush2.bf16.xpose.msra.mxu0 0
    %1239 = vmatprep.subr.bf16.mxu0 0
    %1240 = vmatpush2.bf16.xpose.msra.mxu0 0
    %1241 = vmatprep.mubr.bf16.mxu0 0
    %1242 = vmatmul.mubr.bf16.gmra.mxu0 %v1204
    %v1243 = vpop.f32.mrf.mxu0
    %v1244 = vadd.f32 0.0, %v1243
    %v1245 = vpop.f32.mrf.mxu0
    %v1246 = vpop.f32.mrf.mxu0
    %v1247 = vadd.f32 0.0, %v1246
    %v1248 = vpop.f32.mrf.mxu0
    %1249 = vdwg.mxu0
    %1250 = vrot.lane.b32.xlu0 %v587, 96
    %v1251 = vpop.permute.xlu0 %1250
    %1252 = vrot.lane.b32.xlu0 %v587, 32
    %v1253 = vpop.permute.xlu0 %1252
    %v1255 = vsel %vm593, %v1251, 0
    %v1258 = vsel %vm593, %v1253, 0
    %1260 = vmatprep.subr.bf16.mxu0 0
    %1261 = vmatpush1.bf16.xpose.msra.mxu0 0
    %1262 = vmatprep.subr.bf16.mxu0 0
    %1263 = vmatpush1.bf16.xpose.msra.mxu0 0
    %1264 = vmatprep.subr.bf16.mxu0 0
    %1265 = vmatpush1.bf16.xpose.msra.mxu0 0
    %1266 = vmatprep.subr.bf16.mxu0 0
    %1267 = vmatpush1.bf16.xpose.msra.mxu0 0
    %1268 = vmatprep.subr.bf16.mxu0 0
    %1269 = vmatpush1.bf16.xpose.msra.mxu0 0
    %1270 = vmatprep.subr.bf16.mxu0 0
    %1271 = vmatpush1.bf16.xpose.msra.mxu0 0
    %1272 = vmatprep.subr.bf16.mxu0 0
    %1273 = vmatpush1.bf16.xpose.msra.mxu0 0
    %1274 = vmatprep.subr.bf16.mxu0 0
    %1275 = vmatpush1.bf16.xpose.msra.mxu0 %v1258
    %1276 = vmatprep.subr.bf16.mxu0 0
    %1277 = vmatpush2.bf16.xpose.msra.mxu0 0
    %1278 = vmatprep.subr.bf16.mxu0 0
    %1279 = vmatpush2.bf16.xpose.msra.mxu0 0
    %1280 = vmatprep.subr.bf16.mxu0 0
    %1281 = vmatpush2.bf16.xpose.msra.mxu0 0
    %1282 = vmatprep.subr.bf16.mxu0 0
    %1283 = vmatpush2.bf16.xpose.msra.mxu0 0
    %1284 = vmatprep.subr.bf16.mxu0 0
    %1285 = vmatpush2.bf16.xpose.msra.mxu0 0
    %1286 = vmatprep.subr.bf16.mxu0 0
    %1287 = vmatpush2.bf16.xpose.msra.mxu0 0
    %1288 = vmatprep.subr.bf16.mxu0 0
    %1289 = vmatpush2.bf16.xpose.msra.mxu0 0
    %1290 = vmatprep.subr.bf16.mxu0 0
    %1291 = vmatpush2.bf16.xpose.msra.mxu0 0
    %1292 = vmatprep.mubr.bf16.mxu0 0
    %1293 = vmatmul.mubr.bf16.gmra.mxu0 %v1255
    %v1294 = vpop.f32.mrf.mxu0
    %v1295 = vadd.f32 0.0, %v1294
    %v1296 = vpop.f32.mrf.mxu0
    %v1297 = vpop.f32.mrf.mxu0
    %v1298 = vadd.f32 0.0, %v1297
    %v1299 = vpop.f32.mrf.mxu0
    %1300 = vdwg.mxu0
    %v1301 = vsel %vm593, %v1244, -inf
    %1302 = vmax.xlane.f32.xlu0 %v1301
    %v1303 = vpop.xlane.xlu0 %1302
    %v1304 = vsel %vm593, %v1247, -inf
    %1305 = vmax.xlane.f32.xlu0 %v1304
    %v1306 = vpop.xlane.xlu0 %1305
    %v1307 = vsel %vm593, %v1295, -inf
    %1308 = vmax.xlane.f32.xlu0 %v1307
    %v1309 = vpop.xlane.xlu0 %1308
    %v1310 = vsel %vm593, %v1298, -inf
    %1311 = vmax.xlane.f32.xlu0 %v1310
    %v1312 = vpop.xlane.xlu0 %1311
    %v1313 = vsub.f32 %v1244, %v1303
    %v1314 = vsub.f32 %v1247, %v1306
    %v1315 = vsub.f32 %v1295, %v1309
    %v1316 = vsub.f32 %v1298, %v1312
    %v1317 = vmul.f32 %v1313, 1.442695
    %v1318 = vpow.pop %v1317
    %v1319 = vmul.f32 %v1314, 1.442695
    %v1320 = vpow.pop %v1319
    %v1321 = vmul.f32 %v1315, 1.442695
    %v1322 = vpow.pop %v1321
    %v1323 = vmul.f32 %v1316, 1.442695
    %v1324 = vpow.pop %v1323
    %v1325 = vsel %vm593, %v1318, 0.0
    %1326 = vadd.xlane.f32.xlu0 %v1325
    %v1327 = vpop.xlane.xlu0 %1326
    %v1328 = vsel %vm593, %v1320, 0.0
    %1329 = vadd.xlane.f32.xlu0 %v1328
    %v1330 = vpop.xlane.xlu0 %1329
    %v1331 = vsel %vm593, %v1322, 0.0
    %1332 = vadd.xlane.f32.xlu0 %v1331
    %v1333 = vpop.xlane.xlu0 %1332
    %v1334 = vsel %vm593, %v1324, 0.0
    %1335 = vadd.xlane.f32.xlu0 %v1334
    %v1336 = vpop.xlane.xlu0 %1335
    %v1337 = vpack.c.bf16 %v1320, %v1318
    %v1338 = vpack.c.bf16 %v1324, %v1322
    %1339 = vrot.lane.b32.xlu0 %v588, 96
    %v1340 = vpop.permute.xlu0 %1339
    %v1343 = vsel %vm593, %v1337, 0
    %1345 = vmatprep.subr.bf16.mxu0 0
    %1346 = vmatpush1.bf16.msra.mxu0 0
    %1347 = vmatprep.subr.bf16.mxu0 0
    %1348 = vmatpush1.bf16.msra.mxu0 0
    %1349 = vmatprep.subr.bf16.mxu0 0
    %1350 = vmatpush1.bf16.msra.mxu0 0
    %1351 = vmatprep.subr.bf16.mxu0 0
    %1352 = vmatpush1.bf16.msra.mxu0 0
    %1353 = vmatprep.subr.bf16.mxu0 0
    %1354 = vmatpush1.bf16.msra.mxu0 0
    %1355 = vmatprep.subr.bf16.mxu0 0
    %1356 = vmatpush1.bf16.msra.mxu0 0
    %1357 = vmatprep.subr.bf16.mxu0 0
    %1358 = vmatpush1.bf16.msra.mxu0 0
    %1359 = vmatprep.subr.bf16.mxu0 0
    %1360 = vmatpush1.bf16.msra.mxu0 %v1340
    %1361 = vmatprep.subr.bf16.mxu0 0
    %1362 = vmatpush2.bf16.msra.mxu0 0
    %1363 = vmatprep.subr.bf16.mxu0 0
    %1364 = vmatpush2.bf16.msra.mxu0 0
    %1365 = vmatprep.subr.bf16.mxu0 0
    %1366 = vmatpush2.bf16.msra.mxu0 0
    %1367 = vmatprep.subr.bf16.mxu0 0
    %1368 = vmatpush2.bf16.msra.mxu0 0
    %1369 = vmatprep.subr.bf16.mxu0 0
    %1370 = vmatpush2.bf16.msra.mxu0 0
    %1371 = vmatprep.subr.bf16.mxu0 0
    %1372 = vmatpush2.bf16.msra.mxu0 0
    %1373 = vmatprep.subr.bf16.mxu0 0
    %1374 = vmatpush2.bf16.msra.mxu0 0
    %1375 = vmatprep.subr.bf16.mxu0 0
    %1376 = vmatpush2.bf16.msra.mxu0 0
    %1377 = vmatprep.mubr.bf16.mxu0 0
    %1378 = vmatmul.mubr.bf16.gmra.mxu0 %v1343
    %v1379 = vpop.f32.mrf.mxu0
    %v1380 = vadd.f32 0.0, %v1379
    %v1381 = vpop.f32.mrf.mxu0
    %v1382 = vpop.f32.mrf.mxu0
    %v1383 = vadd.f32 0.0, %v1382
    %v1384 = vpop.f32.mrf.mxu0
    %1385 = vdwg.mxu0
    %1386 = vrot.lane.b32.xlu0 %v589, 96
    %v1387 = vpop.permute.xlu0 %1386
    %v1390 = vsel %vm593, %v1338, 0
    %1392 = vmatprep.subr.bf16.mxu0 0
    %1393 = vmatpush1.bf16.msra.mxu0 0
    %1394 = vmatprep.subr.bf16.mxu0 0
    %1395 = vmatpush1.bf16.msra.mxu0 0
    %1396 = vmatprep.subr.bf16.mxu0 0
    %1397 = vmatpush1.bf16.msra.mxu0 0
    %1398 = vmatprep.subr.bf16.mxu0 0
    %1399 = vmatpush1.bf16.msra.mxu0 0
    %1400 = vmatprep.subr.bf16.mxu0 0
    %1401 = vmatpush1.bf16.msra.mxu0 0
    %1402 = vmatprep.subr.bf16.mxu0 0
    %1403 = vmatpush1.bf16.msra.mxu0 0
    %1404 = vmatprep.subr.bf16.mxu0 0
    %1405 = vmatpush1.bf16.msra.mxu0 0
    %1406 = vmatprep.subr.bf16.mxu0 0
    %1407 = vmatpush1.bf16.msra.mxu0 %v1387
    %1408 = vmatprep.subr.bf16.mxu0 0
    %1409 = vmatpush2.bf16.msra.mxu0 0
    %1410 = vmatprep.subr.bf16.mxu0 0
    %1411 = vmatpush2.bf16.msra.mxu0 0
    %1412 = vmatprep.subr.bf16.mxu0 0
    %1413 = vmatpush2.bf16.msra.mxu0 0
    %1414 = vmatprep.subr.bf16.mxu0 0
    %1415 = vmatpush2.bf16.msra.mxu0 0
    %1416 = vmatprep.subr.bf16.mxu0 0
    %1417 = vmatpush2.bf16.msra.mxu0 0
    %1418 = vmatprep.subr.bf16.mxu0 0
    %1419 = vmatpush2.bf16.msra.mxu0 0
    %1420 = vmatprep.subr.bf16.mxu0 0
    %1421 = vmatpush2.bf16.msra.mxu0 0
    %1422 = vmatprep.subr.bf16.mxu0 0
    %1423 = vmatpush2.bf16.msra.mxu0 0
    %1424 = vmatprep.mubr.bf16.mxu0 0
    %1425 = vmatmul.mubr.bf16.gmra.mxu0 %v1390
    %v1426 = vpop.f32.mrf.mxu0
    %v1427 = vadd.f32 0.0, %v1426
    %v1428 = vpop.f32.mrf.mxu0
    %v1429 = vpop.f32.mrf.mxu0
    %v1430 = vadd.f32 0.0, %v1429
    %v1431 = vpop.f32.mrf.mxu0
    %1432 = vdwg.mxu0
    %v1433 = vrcp.pop %v1327
    %v1434 = vrcp.pop %v1330
    %v1435 = vrcp.pop %v1333
    %v1436 = vrcp.pop %v1336
    %v1437 = vmul.f32 %v1380, %v1433
    %v1438 = vmul.f32 %v1383, %v1434
    %v1439 = vmul.f32 %v1427, %v1435
    %v1440 = vmul.f32 %v1430, %v1436
    %v1441 = vpack.c.bf16 %v1438, %v1437
    %v1442 = vpack.c.bf16 %v1440, %v1439
    %v1443 = vld [vmem:[%s4 + $0x10] sm:$0xf]
    %v1444 = vld [vmem:[%s4 + $0x14] sm:$0xf]
    %v1447 = vunpack.c.l.b16 %v1443
    %v1448 = vunpack.c.l.b16 %v1444
    %v1449 = vpack.c.b16 %v1448, %v1447
    %v1452 = vsel %vm593, %v1441, 0
    %v1455 = vsel %vm593, %v1442, 0
    %1457 = vmatprep.subr.bf16.mxu0 0
    %1458 = vmatpush1.bf16.msra.mxu0 0
    %1459 = vmatprep.subr.bf16.mxu0 0
    %1460 = vmatpush1.bf16.msra.mxu0 0
    %1461 = vmatprep.subr.bf16.mxu0 0
    %1462 = vmatpush1.bf16.msra.mxu0 0
    %1463 = vmatprep.subr.bf16.mxu0 0
    %1464 = vmatpush1.bf16.msra.mxu0 0
    %1465 = vmatprep.subr.bf16.mxu0 0
    %1466 = vmatpush1.bf16.msra.mxu0 0
    %1467 = vmatprep.subr.bf16.mxu0 0
    %1468 = vmatpush1.bf16.msra.mxu0 0
    %1469 = vmatprep.subr.bf16.mxu0 0
    %1470 = vmatpush1.bf16.msra.mxu0 0
    %1471 = vmatprep.subr.bf16.mxu0 0
    %1472 = vmatpush1.bf16.msra.mxu0 %v1449
    %1473 = vmatprep.subr.bf16.mxu0 0
    %1474 = vmatpush2.bf16.msra.mxu0 0
    %1475 = vmatprep.subr.bf16.mxu0 0
    %1476 = vmatpush2.bf16.msra.mxu0 0
    %1477 = vmatprep.subr.bf16.mxu0 0
    %1478 = vmatpush2.bf16.msra.mxu0 0
    %1479 = vmatprep.subr.bf16.mxu0 0
    %1480 = vmatpush2.bf16.msra.mxu0 0
    %1481 = vmatprep.subr.bf16.mxu0 0
    %1482 = vmatpush2.bf16.msra.mxu0 0
    %1483 = vmatprep.subr.bf16.mxu0 0
    %1484 = vmatpush2.bf16.msra.mxu0 0
    %1485 = vmatprep.subr.bf16.mxu0 0
    %1486 = vmatpush2.bf16.msra.mxu0 0
    %1487 = vmatprep.subr.bf16.mxu0 0
    %1488 = vmatpush2.bf16.msra.mxu0 0
    %1489 = vmatprep.mubr.bf16.mxu0 0
    %1490 = vmatmul.mubr.bf16.gmra.mxu0 %v1452
    %v1491 = vpop.f32.mrf.mxu0
    %v1492 = vadd.f32 0.0, %v1491
    %v1493 = vpop.f32.mrf.mxu0
    %v1494 = vpop.f32.mrf.mxu0
    %v1495 = vadd.f32 0.0, %v1494
    %v1496 = vpop.f32.mrf.mxu0
    %1497 = vmatprep.mubr.bf16.mxu0 0
    %1498 = vmatmul.mubr.bf16.gmra.mxu0 %v1455
    %v1499 = vpop.f32.mrf.mxu0
    %v1500 = vadd.f32 0.0, %v1499
    %v1501 = vpop.f32.mrf.mxu0
    %v1502 = vpop.f32.mrf.mxu0
    %v1503 = vadd.f32 0.0, %v1502
    %v1504 = vpop.f32.mrf.mxu0
    %1505 = vdwg.mxu0
    %v1506 = vadd.f32 %v1185, %v1492
    %v1507 = vadd.f32 %v1188, %v1495
    %v1508 = vadd.f32 %v1193, %v1500
    %v1509 = vadd.f32 %v1196, %v1503
    %1510 = vrot.lane.b32.xlu0 %v586, 80
    %v1511 = vpop.permute.xlu0 %1510
    %1512 = vrot.lane.b32.xlu0 %v586, 16
    %v1513 = vpop.permute.xlu0 %1512
    %v1515 = vsel %vm593, %v1511, 0
    %v1518 = vsel %vm593, %v1513, 0
    %1520 = vmatprep.subr.bf16.mxu0 0
    %1521 = vmatpush1.bf16.xpose.msra.mxu0 0
    %1522 = vmatprep.subr.bf16.mxu0 0
    %1523 = vmatpush1.bf16.xpose.msra.mxu0 0
    %1524 = vmatprep.subr.bf16.mxu0 0
    %1525 = vmatpush1.bf16.xpose.msra.mxu0 0
    %1526 = vmatprep.subr.bf16.mxu0 0
    %1527 = vmatpush1.bf16.xpose.msra.mxu0 0
    %1528 = vmatprep.subr.bf16.mxu0 0
    %1529 = vmatpush1.bf16.xpose.msra.mxu0 0
    %1530 = vmatprep.subr.bf16.mxu0 0
    %1531 = vmatpush1.bf16.xpose.msra.mxu0 0
    %1532 = vmatprep.subr.bf16.mxu0 0
    %1533 = vmatpush1.bf16.xpose.msra.mxu0 0
    %1534 = vmatprep.subr.bf16.mxu0 0
    %1535 = vmatpush1.bf16.xpose.msra.mxu0 %v1518
    %1536 = vmatprep.subr.bf16.mxu0 0
    %1537 = vmatpush2.bf16.xpose.msra.mxu0 0
    %1538 = vmatprep.subr.bf16.mxu0 0
    %1539 = vmatpush2.bf16.xpose.msra.mxu0 0
    %1540 = vmatprep.subr.bf16.mxu0 0
    %1541 = vmatpush2.bf16.xpose.msra.mxu0 0
    %1542 = vmatprep.subr.bf16.mxu0 0
    %1543 = vmatpush2.bf16.xpose.msra.mxu0 0
    %1544 = vmatprep.subr.bf16.mxu0 0
    %1545 = vmatpush2.bf16.xpose.msra.mxu0 0
    %1546 = vmatprep.subr.bf16.mxu0 0
    %1547 = vmatpush2.bf16.xpose.msra.mxu0 0
    %1548 = vmatprep.subr.bf16.mxu0 0
    %1549 = vmatpush2.bf16.xpose.msra.mxu0 0
    %1550 = vmatprep.subr.bf16.mxu0 0
    %1551 = vmatpush2.bf16.xpose.msra.mxu0 0
    %1552 = vmatprep.mubr.bf16.mxu0 0
    %1553 = vmatmul.mubr.bf16.gmra.mxu0 %v1515
    %v1554 = vpop.f32.mrf.mxu0
    %v1555 = vadd.f32 0.0, %v1554
    %v1556 = vpop.f32.mrf.mxu0
    %v1557 = vpop.f32.mrf.mxu0
    %v1558 = vadd.f32 0.0, %v1557
    %v1559 = vpop.f32.mrf.mxu0
    %1560 = vdwg.mxu0
    %1561 = vrot.lane.b32.xlu0 %v587, 80
    %v1562 = vpop.permute.xlu0 %1561
    %1563 = vrot.lane.b32.xlu0 %v587, 16
    %v1564 = vpop.permute.xlu0 %1563
    %v1566 = vsel %vm593, %v1562, 0
    %v1569 = vsel %vm593, %v1564, 0
    %1571 = vmatprep.subr.bf16.mxu0 0
    %1572 = vmatpush1.bf16.xpose.msra.mxu0 0
    %1573 = vmatprep.subr.bf16.mxu0 0
    %1574 = vmatpush1.bf16.xpose.msra.mxu0 0
    %1575 = vmatprep.subr.bf16.mxu0 0
    %1576 = vmatpush1.bf16.xpose.msra.mxu0 0
    %1577 = vmatprep.subr.bf16.mxu0 0
    %1578 = vmatpush1.bf16.xpose.msra.mxu0 0
    %1579 = vmatprep.subr.bf16.mxu0 0
    %1580 = vmatpush1.bf16.xpose.msra.mxu0 0
    %1581 = vmatprep.subr.bf16.mxu0 0
    %1582 = vmatpush1.bf16.xpose.msra.mxu0 0
    %1583 = vmatprep.subr.bf16.mxu0 0
    %1584 = vmatpush1.bf16.xpose.msra.mxu0 0
    %1585 = vmatprep.subr.bf16.mxu0 0
    %1586 = vmatpush1.bf16.xpose.msra.mxu0 %v1569
    %1587 = vmatprep.subr.bf16.mxu0 0
    %1588 = vmatpush2.bf16.xpose.msra.mxu0 0
    %1589 = vmatprep.subr.bf16.mxu0 0
    %1590 = vmatpush2.bf16.xpose.msra.mxu0 0
    %1591 = vmatprep.subr.bf16.mxu0 0
    %1592 = vmatpush2.bf16.xpose.msra.mxu0 0
    %1593 = vmatprep.subr.bf16.mxu0 0
    %1594 = vmatpush2.bf16.xpose.msra.mxu0 0
    %1595 = vmatprep.subr.bf16.mxu0 0
    %1596 = vmatpush2.bf16.xpose.msra.mxu0 0
    %1597 = vmatprep.subr.bf16.mxu0 0
    %1598 = vmatpush2.bf16.xpose.msra.mxu0 0
    %1599 = vmatprep.subr.bf16.mxu0 0
    %1600 = vmatpush2.bf16.xpose.msra.mxu0 0
    %1601 = vmatprep.subr.bf16.mxu0 0
    %1602 = vmatpush2.bf16.xpose.msra.mxu0 0
    %1603 = vmatprep.mubr.bf16.mxu0 0
    %1604 = vmatmul.mubr.bf16.gmra.mxu0 %v1566
    %v1605 = vpop.f32.mrf.mxu0
    %v1606 = vadd.f32 0.0, %v1605
    %v1607 = vpop.f32.mrf.mxu0
    %v1608 = vpop.f32.mrf.mxu0
    %v1609 = vadd.f32 0.0, %v1608
    %v1610 = vpop.f32.mrf.mxu0
    %1611 = vdwg.mxu0
    %v1612 = vsel %vm593, %v1555, -inf
    %1613 = vmax.xlane.f32.xlu0 %v1612
    %v1614 = vpop.xlane.xlu0 %1613
    %v1615 = vsel %vm593, %v1558, -inf
    %1616 = vmax.xlane.f32.xlu0 %v1615
    %v1617 = vpop.xlane.xlu0 %1616
    %v1618 = vsel %vm593, %v1606, -inf
    %1619 = vmax.xlane.f32.xlu0 %v1618
    %v1620 = vpop.xlane.xlu0 %1619
    %v1621 = vsel %vm593, %v1609, -inf
    %1622 = vmax.xlane.f32.xlu0 %v1621
    %v1623 = vpop.xlane.xlu0 %1622
    %v1624 = vsub.f32 %v1555, %v1614
    %v1625 = vsub.f32 %v1558, %v1617
    %v1626 = vsub.f32 %v1606, %v1620
    %v1627 = vsub.f32 %v1609, %v1623
    %v1628 = vmul.f32 %v1624, 1.442695
    %v1629 = vpow.pop %v1628
    %v1630 = vmul.f32 %v1625, 1.442695
    %v1631 = vpow.pop %v1630
    %v1632 = vmul.f32 %v1626, 1.442695
    %v1633 = vpow.pop %v1632
    %v1634 = vmul.f32 %v1627, 1.442695
    %v1635 = vpow.pop %v1634
    %v1636 = vsel %vm593, %v1629, 0.0
    %1637 = vadd.xlane.f32.xlu0 %v1636
    %v1638 = vpop.xlane.xlu0 %1637
    %v1639 = vsel %vm593, %v1631, 0.0
    %1640 = vadd.xlane.f32.xlu0 %v1639
    %v1641 = vpop.xlane.xlu0 %1640
    %v1642 = vsel %vm593, %v1633, 0.0
    %1643 = vadd.xlane.f32.xlu0 %v1642
    %v1644 = vpop.xlane.xlu0 %1643
    %v1645 = vsel %vm593, %v1635, 0.0
    %1646 = vadd.xlane.f32.xlu0 %v1645
    %v1647 = vpop.xlane.xlu0 %1646
    %v1648 = vpack.c.bf16 %v1631, %v1629
    %v1649 = vpack.c.bf16 %v1635, %v1633
    %1650 = vrot.lane.b32.xlu0 %v588, 80
    %v1651 = vpop.permute.xlu0 %1650
    %v1654 = vsel %vm593, %v1648, 0
    %1656 = vmatprep.subr.bf16.mxu0 0
    %1657 = vmatpush1.bf16.msra.mxu0 0
    %1658 = vmatprep.subr.bf16.mxu0 0
    %1659 = vmatpush1.bf16.msra.mxu0 0
    %1660 = vmatprep.subr.bf16.mxu0 0
    %1661 = vmatpush1.bf16.msra.mxu0 0
    %1662 = vmatprep.subr.bf16.mxu0 0
    %1663 = vmatpush1.bf16.msra.mxu0 0
    %1664 = vmatprep.subr.bf16.mxu0 0
    %1665 = vmatpush1.bf16.msra.mxu0 0
    %1666 = vmatprep.subr.bf16.mxu0 0
    %1667 = vmatpush1.bf16.msra.mxu0 0
    %1668 = vmatprep.subr.bf16.mxu0 0
    %1669 = vmatpush1.bf16.msra.mxu0 0
    %1670 = vmatprep.subr.bf16.mxu0 0
    %1671 = vmatpush1.bf16.msra.mxu0 %v1651
    %1672 = vmatprep.subr.bf16.mxu0 0
    %1673 = vmatpush2.bf16.msra.mxu0 0
    %1674 = vmatprep.subr.bf16.mxu0 0
    %1675 = vmatpush2.bf16.msra.mxu0 0
    %1676 = vmatprep.subr.bf16.mxu0 0
    %1677 = vmatpush2.bf16.msra.mxu0 0
    %1678 = vmatprep.subr.bf16.mxu0 0
    %1679 = vmatpush2.bf16.msra.mxu0 0
    %1680 = vmatprep.subr.bf16.mxu0 0
    %1681 = vmatpush2.bf16.msra.mxu0 0
    %1682 = vmatprep.subr.bf16.mxu0 0
    %1683 = vmatpush2.bf16.msra.mxu0 0
    %1684 = vmatprep.subr.bf16.mxu0 0
    %1685 = vmatpush2.bf16.msra.mxu0 0
    %1686 = vmatprep.subr.bf16.mxu0 0
    %1687 = vmatpush2.bf16.msra.mxu0 0
    %1688 = vmatprep.mubr.bf16.mxu0 0
    %1689 = vmatmul.mubr.bf16.gmra.mxu0 %v1654
    %v1690 = vpop.f32.mrf.mxu0
    %v1691 = vadd.f32 0.0, %v1690
    %v1692 = vpop.f32.mrf.mxu0
    %v1693 = vpop.f32.mrf.mxu0
    %v1694 = vadd.f32 0.0, %v1693
    %v1695 = vpop.f32.mrf.mxu0
    %1696 = vdwg.mxu0
    %1697 = vrot.lane.b32.xlu0 %v589, 80
    %v1698 = vpop.permute.xlu0 %1697
    %v1701 = vsel %vm593, %v1649, 0
    %1703 = vmatprep.subr.bf16.mxu0 0
    %1704 = vmatpush1.bf16.msra.mxu0 0
    %1705 = vmatprep.subr.bf16.mxu0 0
    %1706 = vmatpush1.bf16.msra.mxu0 0
    %1707 = vmatprep.subr.bf16.mxu0 0
    %1708 = vmatpush1.bf16.msra.mxu0 0
    %1709 = vmatprep.subr.bf16.mxu0 0
    %1710 = vmatpush1.bf16.msra.mxu0 0
    %1711 = vmatprep.subr.bf16.mxu0 0
    %1712 = vmatpush1.bf16.msra.mxu0 0
    %1713 = vmatprep.subr.bf16.mxu0 0
    %1714 = vmatpush1.bf16.msra.mxu0 0
    %1715 = vmatprep.subr.bf16.mxu0 0
    %1716 = vmatpush1.bf16.msra.mxu0 0
    %1717 = vmatprep.subr.bf16.mxu0 0
    %1718 = vmatpush1.bf16.msra.mxu0 %v1698
    %1719 = vmatprep.subr.bf16.mxu0 0
    %1720 = vmatpush2.bf16.msra.mxu0 0
    %1721 = vmatprep.subr.bf16.mxu0 0
    %1722 = vmatpush2.bf16.msra.mxu0 0
    %1723 = vmatprep.subr.bf16.mxu0 0
    %1724 = vmatpush2.bf16.msra.mxu0 0
    %1725 = vmatprep.subr.bf16.mxu0 0
    %1726 = vmatpush2.bf16.msra.mxu0 0
    %1727 = vmatprep.subr.bf16.mxu0 0
    %1728 = vmatpush2.bf16.msra.mxu0 0
    %1729 = vmatprep.subr.bf16.mxu0 0
    %1730 = vmatpush2.bf16.msra.mxu0 0
    %1731 = vmatprep.subr.bf16.mxu0 0
    %1732 = vmatpush2.bf16.msra.mxu0 0
    %1733 = vmatprep.subr.bf16.mxu0 0
    %1734 = vmatpush2.bf16.msra.mxu0 0
    %1735 = vmatprep.mubr.bf16.mxu0 0
    %1736 = vmatmul.mubr.bf16.gmra.mxu0 %v1701
    %v1737 = vpop.f32.mrf.mxu0
    %v1738 = vadd.f32 0.0, %v1737
    %v1739 = vpop.f32.mrf.mxu0
    %v1740 = vpop.f32.mrf.mxu0
    %v1741 = vadd.f32 0.0, %v1740
    %v1742 = vpop.f32.mrf.mxu0
    %1743 = vdwg.mxu0
    %v1744 = vrcp.pop %v1638
    %v1745 = vrcp.pop %v1641
    %v1746 = vrcp.pop %v1644
    %v1747 = vrcp.pop %v1647
    %v1748 = vmul.f32 %v1691, %v1744
    %v1749 = vmul.f32 %v1694, %v1745
    %v1750 = vmul.f32 %v1738, %v1746
    %v1751 = vmul.f32 %v1741, %v1747
    %v1752 = vpack.c.bf16 %v1749, %v1748
    %v1753 = vpack.c.bf16 %v1751, %v1750
    %v1754 = vld [vmem:[%s4 + $0x18] sm:$0xf]
    %v1755 = vld [vmem:[%s4 + $0x1c] sm:$0xf]
    %v1758 = vunpack.c.l.b16 %v1754
    %v1759 = vunpack.c.l.b16 %v1755
    %v1760 = vpack.c.b16 %v1759, %v1758
    %v1763 = vsel %vm593, %v1752, 0
    %v1766 = vsel %vm593, %v1753, 0
    %1768 = vmatprep.subr.bf16.mxu0 0
    %1769 = vmatpush1.bf16.msra.mxu0 0
    %1770 = vmatprep.subr.bf16.mxu0 0
    %1771 = vmatpush1.bf16.msra.mxu0 0
    %1772 = vmatprep.subr.bf16.mxu0 0
    %1773 = vmatpush1.bf16.msra.mxu0 0
    %1774 = vmatprep.subr.bf16.mxu0 0
    %1775 = vmatpush1.bf16.msra.mxu0 0
    %1776 = vmatprep.subr.bf16.mxu0 0
    %1777 = vmatpush1.bf16.msra.mxu0 0
    %1778 = vmatprep.subr.bf16.mxu0 0
    %1779 = vmatpush1.bf16.msra.mxu0 0
    %1780 = vmatprep.subr.bf16.mxu0 0
    %1781 = vmatpush1.bf16.msra.mxu0 0
    %1782 = vmatprep.subr.bf16.mxu0 0
    %1783 = vmatpush1.bf16.msra.mxu0 %v1760
    %1784 = vmatprep.subr.bf16.mxu0 0
    %1785 = vmatpush2.bf16.msra.mxu0 0
    %1786 = vmatprep.subr.bf16.mxu0 0
    %1787 = vmatpush2.bf16.msra.mxu0 0
    %1788 = vmatprep.subr.bf16.mxu0 0
    %1789 = vmatpush2.bf16.msra.mxu0 0
    %1790 = vmatprep.subr.bf16.mxu0 0
    %1791 = vmatpush2.bf16.msra.mxu0 0
    %1792 = vmatprep.subr.bf16.mxu0 0
    %1793 = vmatpush2.bf16.msra.mxu0 0
    %1794 = vmatprep.subr.bf16.mxu0 0
    %1795 = vmatpush2.bf16.msra.mxu0 0
    %1796 = vmatprep.subr.bf16.mxu0 0
    %1797 = vmatpush2.bf16.msra.mxu0 0
    %1798 = vmatprep.subr.bf16.mxu0 0
    %1799 = vmatpush2.bf16.msra.mxu0 0
    %1800 = vmatprep.mubr.bf16.mxu0 0
    %1801 = vmatmul.mubr.bf16.gmra.mxu0 %v1763
    %v1802 = vpop.f32.mrf.mxu0
    %v1803 = vadd.f32 0.0, %v1802
    %v1804 = vpop.f32.mrf.mxu0
    %v1805 = vpop.f32.mrf.mxu0
    %v1806 = vadd.f32 0.0, %v1805
    %v1807 = vpop.f32.mrf.mxu0
    %1808 = vmatprep.mubr.bf16.mxu0 0
    %1809 = vmatmul.mubr.bf16.gmra.mxu0 %v1766
    %v1810 = vpop.f32.mrf.mxu0
    %v1811 = vadd.f32 0.0, %v1810
    %v1812 = vpop.f32.mrf.mxu0
    %v1813 = vpop.f32.mrf.mxu0
    %v1814 = vadd.f32 0.0, %v1813
    %v1815 = vpop.f32.mrf.mxu0
    %1816 = vdwg.mxu0
    %v1817 = vadd.f32 %v1506, %v1803
    %v1818 = vadd.f32 %v1507, %v1806
    %v1819 = vadd.f32 %v1508, %v1811
    %v1820 = vadd.f32 %v1509, %v1814
    %v1821 = vadd.f32 %v409, %v1817
    %v1822 = vadd.f32 %v410, %v1818
    %v1823 = vadd.f32 %v411, %v1819
    %v1824 = vadd.f32 %v412, %v1820
    %v1825 = vld [vmem:[%s8] sm:$0x1]
    %v1827 = vlaneseq
    %v1828 = vshrl.u32 %v1827, 7
    %v1829 = vsub.s32 0, %v1828
    %v1830 = vrot.slane %v1825, %v1829
    %v1832 = vadd.f32 %v1821, %v1830
    %v1833 = vadd.f32 %v1822, %v1830
    %v1834 = vadd.f32 %v1823, %v1830
    %v1835 = vadd.f32 %v1824, %v1830
    %v1836 = vsel %vm38, %v1832, 0.0
    %1837 = vadd.xlane.f32.xlu0 %v1836
    %v1838 = vpop.xlane.xlu0 %1837
    %v1839 = vsel %vm38, %v1833, 0.0
    %1840 = vadd.xlane.f32.xlu0 %v1839
    %v1841 = vpop.xlane.xlu0 %1840
    %v1842 = vsel %vm38, %v1834, 0.0
    %1843 = vadd.xlane.f32.xlu0 %v1842
    %v1844 = vpop.xlane.xlu0 %1843
    %v1845 = vsel %vm38, %v1835, 0.0
    %1846 = vadd.xlane.f32.xlu0 %v1845
    %v1847 = vpop.xlane.xlu0 %1846
    %v1848 = vmul.f32 %v1838, %v51
    %v1849 = vmul.f32 %v1841, %v51
    %v1850 = vmul.f32 %v1844, %v51
    %v1851 = vmul.f32 %v1847, %v51
    %v1852 = vsub.f32 %v1832, %v1848
    %v1853 = vsub.f32 %v1833, %v1849
    %v1854 = vsub.f32 %v1834, %v1850
    %v1855 = vsub.f32 %v1835, %v1851
    %v1856 = vmul.f32 %v1852, %v1852
    %v1857 = vmul.f32 %v1853, %v1853
    %v1858 = vmul.f32 %v1854, %v1854
    %v1859 = vmul.f32 %v1855, %v1855
    %v1860 = vsel %vm38, %v1856, 0.0
    %1861 = vadd.xlane.f32.xlu0 %v1860
    %v1862 = vpop.xlane.xlu0 %1861
    %v1863 = vsel %vm38, %v1857, 0.0
    %1864 = vadd.xlane.f32.xlu0 %v1863
    %v1865 = vpop.xlane.xlu0 %1864
    %v1866 = vsel %vm38, %v1858, 0.0
    %1867 = vadd.xlane.f32.xlu0 %v1866
    %v1868 = vpop.xlane.xlu0 %1867
    %v1869 = vsel %vm38, %v1859, 0.0
    %1870 = vadd.xlane.f32.xlu0 %v1869
    %v1871 = vpop.xlane.xlu0 %1870
    %v1872 = vmul.f32 %v1862, %v51
    %v1873 = vmul.f32 %v1865, %v51
    %v1874 = vmul.f32 %v1868, %v51
    %v1875 = vmul.f32 %v1871, %v51
    %v1876 = vadd.f32 %v1872, 1e-05
    %v1877 = vadd.f32 %v1873, 1e-05
    %v1878 = vadd.f32 %v1874, 1e-05
    %v1879 = vadd.f32 %v1875, 1e-05
    %v1880 = vrsqrt.pop %v1876
    %v1881 = vrsqrt.pop %v1877
    %v1882 = vrsqrt.pop %v1878
    %v1883 = vrsqrt.pop %v1879
    %v1884 = vmul.f32 %v1852, %v1880
    %v1885 = vmul.f32 %v1853, %v1881
    %v1886 = vmul.f32 %v1854, %v1882
    %v1887 = vmul.f32 %v1855, %v1883
    %s1888 = scalar_lea.vmem %s1, 64
    %v1889 = vld [vmem:[%s1888] sm:$0xff]
    %v1890 = vld [vmem:[%s1888 + $0x8] sm:$0xff]
    %v1891 = vld [vmem:[%s1888 + $0x10] sm:$0xff]
    %v1892 = vld [vmem:[%s1888 + $0x18] sm:$0xff]
    %v1893 = vld [vmem:[%s1888 + $0x20] sm:$0xff]
    %v1894 = vld [vmem:[%s1888 + $0x28] sm:$0xff]
    %v1895 = vld [vmem:[%s1888 + $0x30] sm:$0xff]
    %v1896 = vld [vmem:[%s1888 + $0x38] sm:$0xff]
    %s1897 = scalar_lea.vmem %s5, 2
    %v1898 = vld [vmem:[%s1897] sm:$0x3]
    %s1899 = scalar_lea.vmem %s2, 128
    %v1900 = vld [vmem:[%s1899] sm:$0xf]
    %v1901 = vld [vmem:[%s1899 + $0x4] sm:$0xf]
    %v1902 = vld [vmem:[%s1899 + $0x8] sm:$0xf]
    %v1903 = vld [vmem:[%s1899 + $0xc] sm:$0xf]
    %v1904 = vld [vmem:[%s1899 + $0x10] sm:$0xf]
    %v1905 = vld [vmem:[%s1899 + $0x14] sm:$0xf]
    %v1906 = vld [vmem:[%s1899 + $0x18] sm:$0xf]
    %v1907 = vld [vmem:[%s1899 + $0x1c] sm:$0xf]
    %v1908 = vld [vmem:[%s1899 + $0x20] sm:$0xf]
    %v1909 = vld [vmem:[%s1899 + $0x24] sm:$0xf]
    %v1910 = vld [vmem:[%s1899 + $0x28] sm:$0xf]
    %v1911 = vld [vmem:[%s1899 + $0x2c] sm:$0xf]
    %v1912 = vld [vmem:[%s1899 + $0x30] sm:$0xf]
    %v1913 = vld [vmem:[%s1899 + $0x34] sm:$0xf]
    %v1914 = vld [vmem:[%s1899 + $0x38] sm:$0xf]
    %v1915 = vld [vmem:[%s1899 + $0x3c] sm:$0xf]
    %v1916 = vld [vmem:[%s1899 + $0x40] sm:$0xf]
    %v1917 = vld [vmem:[%s1899 + $0x44] sm:$0xf]
    %v1918 = vld [vmem:[%s1899 + $0x48] sm:$0xf]
    %v1919 = vld [vmem:[%s1899 + $0x4c] sm:$0xf]
    %v1920 = vld [vmem:[%s1899 + $0x50] sm:$0xf]
    %v1921 = vld [vmem:[%s1899 + $0x54] sm:$0xf]
    %v1922 = vld [vmem:[%s1899 + $0x58] sm:$0xf]
    %v1923 = vld [vmem:[%s1899 + $0x5c] sm:$0xf]
    %v1924 = vld [vmem:[%s1899 + $0x60] sm:$0xf]
    %v1925 = vld [vmem:[%s1899 + $0x64] sm:$0xf]
    %v1926 = vld [vmem:[%s1899 + $0x68] sm:$0xf]
    %v1927 = vld [vmem:[%s1899 + $0x6c] sm:$0xf]
    %v1928 = vld [vmem:[%s1899 + $0x70] sm:$0xf]
    %v1929 = vld [vmem:[%s1899 + $0x74] sm:$0xf]
    %v1930 = vld [vmem:[%s1899 + $0x78] sm:$0xf]
    %v1931 = vld [vmem:[%s1899 + $0x7c] sm:$0xf]
    %s1932 = scalar_lea.vmem %s6, 1
    %v1933 = vld [vmem:[%s1932] sm:$0x1]
    %v1934 = vpack.c.bf16 %v1885, %v1884
    %v1935 = vpack.c.bf16 %v1887, %v1886
    %v1937 = vlaneseq
    %v1938 = vshrl.u32 %v1937, 7
    %v1939 = vsub.s32 0, %v1938
    %v1940 = vrot.slane %v1898, %v1939
    %v1941 = vlaneseq
    %v1942 = vshrl.u32 %v1941, 7
    %v1943 = vsub.s32 1, %v1942
    %v1944 = vrot.slane %v1898, %v1943
    %v1955 = vunpack.c.l.b16 %v1889
    %v1956 = vunpack.c.h.b16 %v1889
    %v1957 = vunpack.c.l.b16 %v1890
    %v1958 = vunpack.c.h.b16 %v1890
    %v1959 = vunpack.c.l.b16 %v1891
    %v1960 = vunpack.c.h.b16 %v1891
    %v1961 = vunpack.c.l.b16 %v1892
    %v1962 = vunpack.c.h.b16 %v1892
    %v1963 = vunpack.c.l.b16 %v1893
    %v1964 = vunpack.c.h.b16 %v1893
    %v1965 = vunpack.c.l.b16 %v1894
    %v1966 = vunpack.c.h.b16 %v1894
    %v1967 = vunpack.c.l.b16 %v1895
    %v1968 = vunpack.c.h.b16 %v1895
    %v1969 = vunpack.c.l.b16 %v1896
    %v1970 = vunpack.c.h.b16 %v1896
    %v1971 = vpack.c.b16 %v1957, %v1955
    %v1972 = vpack.c.b16 %v1958, %v1956
    %v1973 = vpack.c.b16 %v1961, %v1959
    %v1974 = vpack.c.b16 %v1962, %v1960
    %v1975 = vpack.c.b16 %v1965, %v1963
    %v1976 = vpack.c.b16 %v1966, %v1964
    %v1977 = vpack.c.b16 %v1969, %v1967
    %v1978 = vpack.c.b16 %v1970, %v1968
    %v1988 = vsel %vm38, %v1934, 0
    %v1991 = vsel %vm38, %v1935, 0
    %1993 = vmatprep.subr.bf16.mxu0 0
    %1994 = vmatpush1.bf16.msra.mxu0 0
    %1995 = vmatprep.subr.bf16.mxu0 0
    %1996 = vmatpush1.bf16.msra.mxu0 0
    %1997 = vmatprep.subr.bf16.mxu0 0
    %1998 = vmatpush1.bf16.msra.mxu0 0
    %1999 = vmatprep.subr.bf16.mxu0 0
    %2000 = vmatpush1.bf16.msra.mxu0 0
    %2001 = vmatprep.subr.bf16.mxu0 %v1978
    %2002 = vmatpush1.bf16.msra.mxu0 %v1977
    %2003 = vmatprep.subr.bf16.mxu0 %v1976
    %2004 = vmatpush1.bf16.msra.mxu0 %v1975
    %2005 = vmatprep.subr.bf16.mxu0 %v1974
    %2006 = vmatpush1.bf16.msra.mxu0 %v1973
    %2007 = vmatprep.subr.bf16.mxu0 %v1972
    %2008 = vmatpush1.bf16.msra.mxu0 %v1971
    %2009 = vmatprep.subr.bf16.mxu0 0
    %2010 = vmatpush2.bf16.msra.mxu0 0
    %2011 = vmatprep.subr.bf16.mxu0 0
    %2012 = vmatpush2.bf16.msra.mxu0 0
    %2013 = vmatprep.subr.bf16.mxu0 0
    %2014 = vmatpush2.bf16.msra.mxu0 0
    %2015 = vmatprep.subr.bf16.mxu0 0
    %2016 = vmatpush2.bf16.msra.mxu0 0
    %2017 = vmatprep.subr.bf16.mxu0 0
    %2018 = vmatpush2.bf16.msra.mxu0 0
    %2019 = vmatprep.subr.bf16.mxu0 0
    %2020 = vmatpush2.bf16.msra.mxu0 0
    %2021 = vmatprep.subr.bf16.mxu0 0
    %2022 = vmatpush2.bf16.msra.mxu0 0
    %2023 = vmatprep.subr.bf16.mxu0 0
    %2024 = vmatpush2.bf16.msra.mxu0 0
    %2025 = vmatprep.mubr.bf16.mxu0 0
    %2026 = vmatmul.mubr.bf16.gmra.mxu0 %v1988
    %v2027 = vpop.f32.mrf.mxu0
    %v2028 = vadd.f32 %v1940, %v2027
    %v2029 = vpop.f32.mrf.mxu0
    %v2030 = vadd.f32 %v1944, %v2029
    %v2031 = vpop.f32.mrf.mxu0
    %v2032 = vadd.f32 %v1940, %v2031
    %v2033 = vpop.f32.mrf.mxu0
    %v2034 = vadd.f32 %v1944, %v2033
    %2035 = vmatprep.mubr.bf16.mxu0 0
    %2036 = vmatmul.mubr.bf16.gmra.mxu0 %v1991
    %v2037 = vpop.f32.mrf.mxu0
    %v2038 = vadd.f32 %v1940, %v2037
    %v2039 = vpop.f32.mrf.mxu0
    %v2040 = vadd.f32 %v1944, %v2039
    %v2041 = vpop.f32.mrf.mxu0
    %v2042 = vadd.f32 %v1940, %v2041
    %v2043 = vpop.f32.mrf.mxu0
    %v2044 = vadd.f32 %v1944, %v2043
    %2045 = vdwg.mxu0
    %v2046 = vmax.f32 %v2028, 0.0
    %v2047 = vmax.f32 %v2030, 0.0
    %v2048 = vmax.f32 %v2032, 0.0
    %v2049 = vmax.f32 %v2034, 0.0
    %v2050 = vmax.f32 %v2038, 0.0
    %v2051 = vmax.f32 %v2040, 0.0
    %v2052 = vmax.f32 %v2042, 0.0
    %v2053 = vmax.f32 %v2044, 0.0
    %v2054 = vpack.c.bf16 %v2048, %v2046
    %v2055 = vpack.c.bf16 %v2049, %v2047
    %v2056 = vpack.c.bf16 %v2052, %v2050
    %v2057 = vpack.c.bf16 %v2053, %v2051
    %v2059 = vlaneseq
    %v2060 = vshrl.u32 %v2059, 7
    %v2061 = vsub.s32 0, %v2060
    %v2062 = vrot.slane %v1933, %v2061
    %v2096 = vunpack.c.l.b16 %v1900
    %v2097 = vunpack.c.l.b16 %v1901
    %v2098 = vunpack.c.l.b16 %v1902
    %v2099 = vunpack.c.l.b16 %v1903
    %v2100 = vunpack.c.l.b16 %v1904
    %v2101 = vunpack.c.l.b16 %v1905
    %v2102 = vunpack.c.l.b16 %v1906
    %v2103 = vunpack.c.l.b16 %v1907
    %v2104 = vunpack.c.l.b16 %v1908
    %v2105 = vunpack.c.l.b16 %v1909
    %v2106 = vunpack.c.l.b16 %v1910
    %v2107 = vunpack.c.l.b16 %v1911
    %v2108 = vunpack.c.l.b16 %v1912
    %v2109 = vunpack.c.l.b16 %v1913
    %v2110 = vunpack.c.l.b16 %v1914
    %v2111 = vunpack.c.l.b16 %v1915
    %v2112 = vunpack.c.l.b16 %v1916
    %v2113 = vunpack.c.l.b16 %v1917
    %v2114 = vunpack.c.l.b16 %v1918
    %v2115 = vunpack.c.l.b16 %v1919
    %v2116 = vunpack.c.l.b16 %v1920
    %v2117 = vunpack.c.l.b16 %v1921
    %v2118 = vunpack.c.l.b16 %v1922
    %v2119 = vunpack.c.l.b16 %v1923
    %v2120 = vunpack.c.l.b16 %v1924
    %v2121 = vunpack.c.l.b16 %v1925
    %v2122 = vunpack.c.l.b16 %v1926
    %v2123 = vunpack.c.l.b16 %v1927
    %v2124 = vunpack.c.l.b16 %v1928
    %v2125 = vunpack.c.l.b16 %v1929
    %v2126 = vunpack.c.l.b16 %v1930
    %v2127 = vunpack.c.l.b16 %v1931
    %v2128 = vpack.c.b16 %v2097, %v2096
    %v2129 = vpack.c.b16 %v2099, %v2098
    %v2130 = vpack.c.b16 %v2101, %v2100
    %v2131 = vpack.c.b16 %v2103, %v2102
    %v2132 = vpack.c.b16 %v2105, %v2104
    %v2133 = vpack.c.b16 %v2107, %v2106
    %v2134 = vpack.c.b16 %v2109, %v2108
    %v2135 = vpack.c.b16 %v2111, %v2110
    %v2136 = vpack.c.b16 %v2113, %v2112
    %v2137 = vpack.c.b16 %v2115, %v2114
    %v2138 = vpack.c.b16 %v2117, %v2116
    %v2139 = vpack.c.b16 %v2119, %v2118
    %v2140 = vpack.c.b16 %v2121, %v2120
    %v2141 = vpack.c.b16 %v2123, %v2122
    %v2142 = vpack.c.b16 %v2125, %v2124
    %v2143 = vpack.c.b16 %v2127, %v2126
    %2160 = vmatprep.subr.bf16.mxu0 0
    %2161 = vmatpush1.bf16.msra.mxu0 %v2135
    %2162 = vmatprep.subr.bf16.mxu0 0
    %2163 = vmatpush1.bf16.msra.mxu0 %v2134
    %2164 = vmatprep.subr.bf16.mxu0 0
    %2165 = vmatpush1.bf16.msra.mxu0 %v2133
    %2166 = vmatprep.subr.bf16.mxu0 0
    %2167 = vmatpush1.bf16.msra.mxu0 %v2132
    %2168 = vmatprep.subr.bf16.mxu0 0
    %2169 = vmatpush1.bf16.msra.mxu0 %v2131
    %2170 = vmatprep.subr.bf16.mxu0 0
    %2171 = vmatpush1.bf16.msra.mxu0 %v2130
    %2172 = vmatprep.subr.bf16.mxu0 0
    %2173 = vmatpush1.bf16.msra.mxu0 %v2129
    %2174 = vmatprep.subr.bf16.mxu0 0
    %2175 = vmatpush1.bf16.msra.mxu0 %v2128
    %2176 = vmatprep.subr.bf16.mxu0 0
    %2177 = vmatpush2.bf16.msra.mxu0 %v2143
    %2178 = vmatprep.subr.bf16.mxu0 0
    %2179 = vmatpush2.bf16.msra.mxu0 %v2142
    %2180 = vmatprep.subr.bf16.mxu0 0
    %2181 = vmatpush2.bf16.msra.mxu0 %v2141
    %2182 = vmatprep.subr.bf16.mxu0 0
    %2183 = vmatpush2.bf16.msra.mxu0 %v2140
    %2184 = vmatprep.subr.bf16.mxu0 0
    %2185 = vmatpush2.bf16.msra.mxu0 %v2139
    %2186 = vmatprep.subr.bf16.mxu0 0
    %2187 = vmatpush2.bf16.msra.mxu0 %v2138
    %2188 = vmatprep.subr.bf16.mxu0 0
    %2189 = vmatpush2.bf16.msra.mxu0 %v2137
    %2190 = vmatprep.subr.bf16.mxu0 0
    %2191 = vmatpush2.bf16.msra.mxu0 %v2136
    %2192 = vmatprep.mubr.bf16.mxu0 %v2055
    %2193 = vmatmul.mubr.bf16.gmra.mxu0 %v2054
    %v2194 = vpop.f32.mrf.mxu0
    %v2195 = vadd.f32 %v2062, %v2194
    %v2196 = vpop.f32.mrf.mxu0
    %v2197 = vpop.f32.mrf.mxu0
    %v2198 = vadd.f32 %v2062, %v2197
    %v2199 = vpop.f32.mrf.mxu0
    %2200 = vmatprep.mubr.bf16.mxu0 %v2057
    %2201 = vmatmul.mubr.bf16.gmra.mxu0 %v2056
    %v2202 = vpop.f32.mrf.mxu0
    %v2203 = vadd.f32 %v2062, %v2202
    %v2204 = vpop.f32.mrf.mxu0
    %v2205 = vpop.f32.mrf.mxu0
    %v2206 = vadd.f32 %v2062, %v2205
    %v2207 = vpop.f32.mrf.mxu0
    %2208 = vdwg.mxu0
    %v2209 = vadd.f32 %v1832, %v2195
    %v2210 = vadd.f32 %v1833, %v2198
    %v2211 = vadd.f32 %v1834, %v2203
    %v2212 = vadd.f32 %v1835, %v2206
    %2213 = vst.msk [vmem:[#allocation2] sm:$0xff] %vm38, %v2209
    %2214 = vst.msk [vmem:[#allocation2 + $0x8] sm:$0xff] %vm38, %v2210
    %2215 = vst.msk [vmem:[#allocation2 + $0x10] sm:$0xff] %vm38, %v2211
    %2216 = vst.msk [vmem:[#allocation2 + $0x18] sm:$0xff] %vm38, %v2212
    // Predicated region
    $region38: #{tpu_custom_call.1} parent=1 // pred_check
      _
    $region39: #{tpu_custom_call.1} parent=1 // pred_check_branch
      %2218 = sbr.rel (0) target = $region41
    $region40: #{tpu_custom_call.1} parent=1 // pred_region
      %s2220 = ssub.s32 512, 512
      %2221 = vsyncadd [#allocation3], %s2220
      %s2222 = sshll.u32 [#allocation2], 4
      %s2223 = int_to_ptr.vmem [resolvable:$true] %s2222
      %2228 = dma.vmem_to_hbm [thread:$0]  %s2223, 512, %s9, [#allocation3], 128, 128, 8
    $region41: #{tpu_custom_call.1} parent=1 // pred_fallthru
      _
    // Predicated region
    $region42: #{tpu_custom_call.1} parent=1 // pred_check
      _
    $region43: #{tpu_custom_call.1} parent=1 // pred_check_branch
      %2230 = sbr.rel (0) target = $region45
    $region44: #{tpu_custom_call.1} parent=1 // pred_region
      %2231 = dma.done [#allocation3], 512
    $region45: #{tpu_custom_call.1} parent=1 // pred_fallthru
      _
    %2232 = vsyncpa [#allocation3], 1

</llo_original>
